<compile_context>
chip_gen: v7x
topology: tpu7x:2x2x1
jax: 0.10.0
libtpu: 0.0.40
codegen_flags: <defaults>
</compile_context>

<pallas_src>
import functools
import math

import jax
import jax.numpy as jnp
from jax.experimental import pallas as pl
from jax.experimental.pallas import tpu as pltpu

_LANES = 1024          # lane-dense last dim (large multiple of 128)
_MAX_TILE_ROWS = 256   # 256*1024*4B = 1 MiB per buffer


def _round_up(v, m):
    return ((v + m - 1) // m) * m


def _mix32(x):
    """lowbias32-style avalanche hash on uint32 arrays (VPU-only ops)."""
    x = x ^ (x >> 16)
    x = x * jnp.uint32(0x7FEB352D)
    x = x ^ (x >> 15)
    x = x * jnp.uint32(0x846CA68B)
    x = x ^ (x >> 16)
    return x


def _add_gaussian_noise_kernel(seed_ref, x_ref, o_ref, *, mean, std):
    tile_rows, lanes = x_ref.shape
    half = tile_rows // 2  # tile_rows is always even (wrapper guarantees it)

    # Globally-unique per-element counters: tile index is mixed in, so grid
    # steps never repeat a stream even though the user seed is one scalar.
    base_row = (pl.program_id(0) * half).astype(jnp.uint32)
    row = jax.lax.broadcasted_iota(jnp.int32, (half, lanes), 0).astype(jnp.uint32)
    col = jax.lax.broadcasted_iota(jnp.int32, (half, lanes), 1).astype(jnp.uint32)
    ctr = (base_row + row) * jnp.uint32(lanes) + col

    seed32 = seed_ref[0].astype(jnp.uint32)
    bits1 = _mix32(ctr ^ (seed32 * jnp.uint32(0x9E3779B1)))
    bits2 = _mix32(ctr ^ (seed32 * jnp.uint32(0x85EBCA77) + jnp.uint32(0x165667B1)))

    # Uniforms via the exponent/mantissa bitcast trick: top 23 bits as mantissa
    # ORed with exponent of 1.0 -> float in [1, 2).
    one_bits = jnp.uint32(0x3F800000)
    f1 = jax.lax.bitcast_convert_type((bits1 >> 9) | one_bits, jnp.float32)
    f2 = jax.lax.bitcast_convert_type((bits2 >> 9) | one_bits, jnp.float32)
    u1 = 2.0 - f1  # in (0, 1] -> log(u1) is finite
    u2 = f2 - 1.0  # in [0, 1)

    # Paired Box-Muller: one log+sqrt yields two normals (cos and sin halves).
    r = jnp.sqrt(-2.0 * jnp.log(u1))
    theta = (2.0 * math.pi) * u2
    z = jnp.concatenate([r * jnp.cos(theta), r * jnp.sin(theta)], axis=0)

    noise = z * jnp.float32(std) + jnp.float32(mean)
    y = x_ref[...] + noise.astype(x_ref.dtype)
    o_ref[...] = jnp.clip(y, 0.0, 1.0)


def add_gaussian_noise(x, seed, mean=0.0, std=1.0):
    """x: (N, C, H, W) float32. Returns clamp(x + N(mean, std^2), 0, 1)."""
    orig_shape = x.shape
    total = x.size

    # Lane-dense slab: (rows, 1024). rows rounded to an even tile multiple so
    # the block shape is either divisible by 8 or equal to the full dim.
    rows = max(2, _round_up((total + _LANES - 1) // _LANES, 2))
    tile_rows = min(_MAX_TILE_ROWS, rows)
    rows = _round_up(rows, tile_rows)
    padded = rows * _LANES

    xf = x.reshape(-1)
    if padded != total:
        xf = jnp.pad(xf, (0, padded - total))
    x2 = xf.reshape(rows, _LANES)

    kernel = functools.partial(
        _add_gaussian_noise_kernel, mean=float(mean), std=float(std)
    )

    cost = pl.CostEstimate(
        flops=32 * padded,                        # hash + Box-Muller VPU work
        transcendentals=2 * padded,               # (log+sqrt+sin+cos) / 2 elems
        bytes_accessed=2 * padded * x2.dtype.itemsize,
    )

    out2 = pl.pallas_call(
        kernel,
        out_shape=jax.ShapeDtypeStruct(x2.shape, x2.dtype),
        grid=(rows // tile_rows,),
        in_specs=[
            pl.BlockSpec(memory_space=pltpu.MemorySpace.SMEM),      # seed scalar
            pl.BlockSpec((tile_rows, _LANES), lambda i: (i, 0)),    # x tile
        ],
        out_specs=pl.BlockSpec((tile_rows, _LANES), lambda i: (i, 0)),
        compiler_params=pltpu.CompilerParams(
            dimension_semantics=("parallel",)
        ),
        cost_estimate=cost,
    )(jnp.asarray([seed], dtype=jnp.int32), x2)

    return out2.reshape(-1)[:total].reshape(orig_shape)


if __name__ == "__main__":
    key = jax.random.PRNGKey(0)
    # Small NCHW input consistent with the module's forward.
    x = jax.random.uniform(key, (2, 4, 16, 16), dtype=jnp.float32)

    y = add_gaussian_noise(x, seed=0, mean=0.0, std=1.0)
    y = jax.block_until_ready(y)

    # Sanity: same shape/dtype, clamped to [0, 1], noise actually applied.
    assert y.shape == x.shape and y.dtype == x.dtype
    assert float(jnp.min(y)) >= 0.0 and float(jnp.max(y)) <= 1.0
    assert float(jnp.mean(jnp.abs(y - x))) > 1e-3

    print("KERNEL_OK")
</pallas_src>

<mosaic_0001>
module attributes {stable_mosaic.version = 11 : i64} {
  func.func @_add_gaussian_noise_kernel(%arg0: i32, %arg1: memref<1xi32, #tpu.memory_space<smem>>, %arg2: memref<2x1024xf32, #tpu.memory_space<vmem>>, %arg3: memref<2x1024xf32, #tpu.memory_space<vmem>>) attributes {dimension_semantics = [#tpu.dimension_semantics<parallel>], iteration_bounds = array<i64: 1>, scalar_prefetch = 0 : i64, scratch_operands = 0 : i64, tpu.core_type = #tpu.core_type<tc>, window_params = [{transform_indices = @transform_0, window_bounds = array<i64: 1>}, {transform_indices = @transform_1, window_bounds = array<i64: 2, 1024>}, {transform_indices = @transform_2, window_bounds = array<i64: 2, 1024>}]} {
    %c1_i32 = arith.constant 1 : i32
    %0 = arith.muli %arg0, %c1_i32 : i32
    %1 = tpu.iota {dimensions = array<i32: 0>} : vector<1x1024xi32>
    %2 = tpu.iota {dimensions = array<i32: 1>} : vector<1x1024xi32>
    %3 = vector.broadcast %0 : i32 to vector<1x1024xi32>
    %4 = arith.addi %3, %1 : vector<1x1024xi32>
    %c1024_i32 = arith.constant 1024 : i32
    %5 = vector.broadcast %c1024_i32 : i32 to vector<1x1024xi32>
    %6 = arith.muli %4, %5 : vector<1x1024xi32>
    %7 = arith.addi %6, %2 : vector<1x1024xi32>
    %c0 = arith.constant 0 : index
    %8 = memref.load %arg1[%c0] : memref<1xi32, #tpu.memory_space<smem>>
    %c-1640531535_i32 = arith.constant -1640531535 : i32
    %9 = arith.muli %8, %c-1640531535_i32 : i32
    %10 = vector.broadcast %9 : i32 to vector<1x1024xi32>
    %11 = arith.xori %7, %10 : vector<1x1024xi32>
    %c16_i32 = arith.constant 16 : i32
    %12 = vector.broadcast %c16_i32 : i32 to vector<1x1024xi32>
    %13 = arith.shrui %11, %12 : vector<1x1024xi32>
    %14 = arith.xori %11, %13 : vector<1x1024xi32>
    %c2146121005_i32 = arith.constant 2146121005 : i32
    %15 = vector.broadcast %c2146121005_i32 : i32 to vector<1x1024xi32>
    %16 = arith.muli %14, %15 : vector<1x1024xi32>
    %c15_i32 = arith.constant 15 : i32
    %17 = vector.broadcast %c15_i32 : i32 to vector<1x1024xi32>
    %18 = arith.shrui %16, %17 : vector<1x1024xi32>
    %19 = arith.xori %16, %18 : vector<1x1024xi32>
    %c-2073254261_i32 = arith.constant -2073254261 : i32
    %20 = vector.broadcast %c-2073254261_i32 : i32 to vector<1x1024xi32>
    %21 = arith.muli %19, %20 : vector<1x1024xi32>
    %c16_i32_0 = arith.constant 16 : i32
    %22 = vector.broadcast %c16_i32_0 : i32 to vector<1x1024xi32>
    %23 = arith.shrui %21, %22 : vector<1x1024xi32>
    %24 = arith.xori %21, %23 : vector<1x1024xi32>
    %c-2048144777_i32 = arith.constant -2048144777 : i32
    %25 = arith.muli %8, %c-2048144777_i32 : i32
    %c374761393_i32 = arith.constant 374761393 : i32
    %26 = arith.addi %25, %c374761393_i32 : i32
    %27 = vector.broadcast %26 : i32 to vector<1x1024xi32>
    %28 = arith.xori %7, %27 : vector<1x1024xi32>
    %c16_i32_1 = arith.constant 16 : i32
    %29 = vector.broadcast %c16_i32_1 : i32 to vector<1x1024xi32>
    %30 = arith.shrui %28, %29 : vector<1x1024xi32>
    %31 = arith.xori %28, %30 : vector<1x1024xi32>
    %c2146121005_i32_2 = arith.constant 2146121005 : i32
    %32 = vector.broadcast %c2146121005_i32_2 : i32 to vector<1x1024xi32>
    %33 = arith.muli %31, %32 : vector<1x1024xi32>
    %c15_i32_3 = arith.constant 15 : i32
    %34 = vector.broadcast %c15_i32_3 : i32 to vector<1x1024xi32>
    %35 = arith.shrui %33, %34 : vector<1x1024xi32>
    %36 = arith.xori %33, %35 : vector<1x1024xi32>
    %c-2073254261_i32_4 = arith.constant -2073254261 : i32
    %37 = vector.broadcast %c-2073254261_i32_4 : i32 to vector<1x1024xi32>
    %38 = arith.muli %36, %37 : vector<1x1024xi32>
    %c16_i32_5 = arith.constant 16 : i32
    %39 = vector.broadcast %c16_i32_5 : i32 to vector<1x1024xi32>
    %40 = arith.shrui %38, %39 : vector<1x1024xi32>
    %41 = arith.xori %38, %40 : vector<1x1024xi32>
    %c9_i32 = arith.constant 9 : i32
    %42 = vector.broadcast %c9_i32 : i32 to vector<1x1024xi32>
    %43 = arith.shrui %24, %42 : vector<1x1024xi32>
    %c1065353216_i32 = arith.constant 1065353216 : i32
    %44 = vector.broadcast %c1065353216_i32 : i32 to vector<1x1024xi32>
    %45 = arith.ori %43, %44 : vector<1x1024xi32>
    %46 = tpu.bitcast %45 : vector<1x1024xi32> -> vector<1x1024xf32>
    %c9_i32_6 = arith.constant 9 : i32
    %47 = vector.broadcast %c9_i32_6 : i32 to vector<1x1024xi32>
    %48 = arith.shrui %41, %47 : vector<1x1024xi32>
    %c1065353216_i32_7 = arith.constant 1065353216 : i32
    %49 = vector.broadcast %c1065353216_i32_7 : i32 to vector<1x1024xi32>
    %50 = arith.ori %48, %49 : vector<1x1024xi32>
    %51 = tpu.bitcast %50 : vector<1x1024xi32> -> vector<1x1024xf32>
    %cst = arith.constant 2.000000e+00 : f32
    %52 = vector.broadcast %cst : f32 to vector<1x1024xf32>
    %53 = arith.subf %52, %46 : vector<1x1024xf32>
    %cst_8 = arith.constant 1.000000e+00 : f32
    %54 = vector.broadcast %cst_8 : f32 to vector<1x1024xf32>
    %55 = arith.subf %51, %54 : vector<1x1024xf32>
    %56 = math.log %53 : vector<1x1024xf32>
    %cst_9 = arith.constant -2.000000e+00 : f32
    %57 = vector.broadcast %cst_9 : f32 to vector<1x1024xf32>
    %58 = arith.mulf %57, %56 : vector<1x1024xf32>
    %59 = math.sqrt %58 : vector<1x1024xf32>
    %cst_10 = arith.constant 6.28318548 : f32
    %60 = vector.broadcast %cst_10 : f32 to vector<1x1024xf32>
    %61 = arith.mulf %60, %55 : vector<1x1024xf32>
    %62 = math.cos %61 : vector<1x1024xf32>
    %63 = arith.mulf %59, %62 : vector<1x1024xf32>
    %64 = math.sin %61 : vector<1x1024xf32>
    %65 = arith.mulf %59, %64 : vector<1x1024xf32>
    %66 = tpu.concatenate %63, %65 in 0 : vector<1x1024xf32>, vector<1x1024xf32> -> vector<2x1024xf32>
    %cst_11 = arith.constant 1.000000e+00 : f32
    %67 = vector.broadcast %cst_11 : f32 to vector<2x1024xf32>
    %68 = arith.mulf %66, %67 : vector<2x1024xf32>
    %cst_12 = arith.constant 0.000000e+00 : f32
    %69 = vector.broadcast %cst_12 : f32 to vector<2x1024xf32>
    %70 = arith.addf %68, %69 : vector<2x1024xf32>
    %c0_13 = arith.constant 0 : index
    %c0_14 = arith.constant 0 : index
    %71 = vector.load %arg2[%c0_13, %c0_14] : memref<2x1024xf32, #tpu.memory_space<vmem>>, vector<2x1024xf32>
    %72 = arith.addf %71, %70 : vector<2x1024xf32>
    %cst_15 = arith.constant 0.000000e+00 : f32
    %cst_16 = arith.constant 1.000000e+00 : f32
    %73 = vector.broadcast %cst_15 : f32 to vector<2x1024xf32>
    %74 = arith.maximumf %73, %72 : vector<2x1024xf32>
    %75 = vector.broadcast %cst_16 : f32 to vector<2x1024xf32>
    %76 = arith.minimumf %75, %74 : vector<2x1024xf32>
    %c0_17 = arith.constant 0 : index
    %c0_18 = arith.constant 0 : index
    %77 = vector.load %arg3[%c0_17, %c0_18] : memref<2x1024xf32, #tpu.memory_space<vmem>>, vector<2x1024xf32>
    tpu.vector_store %arg3[%c0_17, %c0_18], %76 {strides = array<i32>} : memref<2x1024xf32, #tpu.memory_space<vmem>>, vector<2x1024xf32>,
    return
  }
  func.func @transform_0(%arg0: i32) -> i32 {
    %c0_i32 = arith.constant 0 : i32
    %c0_i32_0 = arith.constant 0 : i32
    return %c0_i32 : i32
  }
  func.func @transform_1(%arg0: i32) -> (i32, i32) {
    %c0_i32 = arith.constant 0 : i32
    %c0_i32_0 = arith.constant 0 : i32
    return %arg0, %c0_i32 : i32, i32
  }
  func.func @transform_2(%arg0: i32) -> (i32, i32) {
    %c0_i32 = arith.constant 0 : i32
    %c0_i32_0 = arith.constant 0 : i32
    return %arg0, %c0_i32 : i32, i32
  }
}

</mosaic_0001>

<llo_original>
// kernel: tpu_custom_call.1
$region0: #{tpu_custom_call.1}
  #allocation0 [shape = 'u32[]', space=smem, size = 0x4, offset = 0x4, fixed_abs, tag = 'smem constant byte address 0x4 - core index']
  #allocation1 [shape = 'u32[144,128]{1,0:T(1,128)}', space=vmem, size = 0x12000, scoped, tag = 'internal scratch']
  #allocation2 [shape = 's32[1]{0:T(128)S(6)}', space=smem, size = 0x200, scoped, tag = 'scoped memory for tpu_custom_call.1']
  %s0 = inlined_call_operand.<no memory space> [shape: s32[1], index: 0, kind: input, shape index: {}]
  %s1 = inlined_call_operand.hbm [shape: f32[2,1024], index: 1, kind: input, shape index: {}]
  %s2 = inlined_call_operand.hbm [shape: f32[2,1024], index: 2, kind: output, shape index: {}]
  %s3 = sld [smem:[#allocation0]]
  $region22: #{tpu_custom_call.1} parent=0
    _
  %s5 = ssub.s32 1, %s3
  %s6 = scalar_select 0, %s5, %s3
  %7 = sst [smem:[#allocation2]] %s0
  $region1: #{tpu_custom_call.1} parent=0
    #allocation3 [shape = 'u8[8192]{0}', space=vmem, size = 0x2000, scoped, tag = 'input window, operand 1, single buffered']
    #allocation4 [shape = 's32[1]{0}', space=sflag, size = 0x4, scoped, tag = 'scoped memory for tpu_custom_call.1']
    #allocation5 [shape = 's32[1]{0}', space=sflag, size = 0x4, scoped, tag = 'scoped memory for tpu_custom_call.1']
    #allocation6 [shape = 'u8[8192]{0}', space=vmem, size = 0x2000, scoped, tag = 'output window, operand 0, single buffered']
    %8 = vsyncpa [#allocation4], 0
    %9 = vsyncpa [#allocation5], 0
    // Predicated region
    $region2: #{tpu_custom_call.1} parent=1 // pred_check
      _
    $region3: #{tpu_custom_call.1} parent=1 // pred_check_branch
      %11 = sbr.rel (0) target = $region5
    $region4: #{tpu_custom_call.1} parent=1 // pred_region
      _
    $region5: #{tpu_custom_call.1} parent=1 // pred_fallthru
      _
    // Predicated region
    $region6: #{tpu_custom_call.1} parent=1 // pred_check
      _
    $region7: #{tpu_custom_call.1} parent=1 // pred_check_branch
      %13 = sbr.rel (0) target = $region9
    $region8: #{tpu_custom_call.1} parent=1 // pred_region
      %s15 = ssub.s32 256, 256
      %16 = vsyncadd [#allocation4], %s15
      %s18 = sshll.u32 [#allocation3], 4
      %s19 = int_to_ptr.vmem [resolvable:$true] %s18
      %21 = dma.hbm_to_vmem [thread:$0]  %s1, 256, %s19, [#allocation4]
    $region9: #{tpu_custom_call.1} parent=1 // pred_fallthru
      _
    // Predicated region
    $region10: #{tpu_custom_call.1} parent=1 // pred_check
      _
    $region11: #{tpu_custom_call.1} parent=1 // pred_check_branch
      %23 = sbr.rel (0) target = $region13
    $region12: #{tpu_custom_call.1} parent=1 // pred_region
      %24 = dma.done [#allocation4], 256
    $region13: #{tpu_custom_call.1} parent=1 // pred_fallthru
      _
    %v25 = vlaneseq
    %v26 = vshrl.u32 %v25, 7
    %v27 = vlaneseq
    %v28 = vand.u32 %v27, 127
    %v29 = vadd.s32 %v28, 128
    %v30 = vadd.s32 %v28, 256
    %v31 = vadd.s32 %v28, 384
    %v32 = vadd.s32 %v28, 512
    %v33 = vadd.s32 %v28, 640
    %v34 = vadd.s32 %v28, 768
    %v35 = vadd.s32 %v28, 896
    %v36 = vstv 0
    %v37 = vadd.s32 %v36, %v26
    %v38 = vmul.u32 %v37, 1024
    %v39 = vadd.s32 %v38, %v28
    %v40 = vadd.s32 %v38, %v29
    %v41 = vadd.s32 %v38, %v30
    %v42 = vadd.s32 %v38, %v31
    %v43 = vadd.s32 %v38, %v32
    %v44 = vadd.s32 %v38, %v33
    %v45 = vadd.s32 %v38, %v34
    %v46 = vadd.s32 %v38, %v35
    %s47 = sld [smem:[#allocation2]]
    %s48 = smul.u32 %s47, 2654435761
    %v49 = vstv %s48
    %v50 = vxor.u32 %v39, %v49
    %v51 = vxor.u32 %v40, %v49
    %v52 = vxor.u32 %v41, %v49
    %v53 = vxor.u32 %v42, %v49
    %v54 = vxor.u32 %v43, %v49
    %v55 = vxor.u32 %v44, %v49
    %v56 = vxor.u32 %v45, %v49
    %v57 = vxor.u32 %v46, %v49
    %v58 = vshrl.u32 %v50, 16
    %v59 = vshrl.u32 %v51, 16
    %v60 = vshrl.u32 %v52, 16
    %v61 = vshrl.u32 %v53, 16
    %v62 = vshrl.u32 %v54, 16
    %v63 = vshrl.u32 %v55, 16
    %v64 = vshrl.u32 %v56, 16
    %v65 = vshrl.u32 %v57, 16
    %v66 = vxor.u32 %v50, %v58
    %v67 = vxor.u32 %v51, %v59
    %v68 = vxor.u32 %v52, %v60
    %v69 = vxor.u32 %v53, %v61
    %v70 = vxor.u32 %v54, %v62
    %v71 = vxor.u32 %v55, %v63
    %v72 = vxor.u32 %v56, %v64
    %v73 = vxor.u32 %v57, %v65
    %v74 = vmul.u32 %v66, 2146121005
    %v75 = vmul.u32 %v67, 2146121005
    %v76 = vmul.u32 %v68, 2146121005
    %v77 = vmul.u32 %v69, 2146121005
    %v78 = vmul.u32 %v70, 2146121005
    %v79 = vmul.u32 %v71, 2146121005
    %v80 = vmul.u32 %v72, 2146121005
    %v81 = vmul.u32 %v73, 2146121005
    %v82 = vshrl.u32 %v74, 15
    %v83 = vshrl.u32 %v75, 15
    %v84 = vshrl.u32 %v76, 15
    %v85 = vshrl.u32 %v77, 15
    %v86 = vshrl.u32 %v78, 15
    %v87 = vshrl.u32 %v79, 15
    %v88 = vshrl.u32 %v80, 15
    %v89 = vshrl.u32 %v81, 15
    %v90 = vxor.u32 %v74, %v82
    %v91 = vxor.u32 %v75, %v83
    %v92 = vxor.u32 %v76, %v84
    %v93 = vxor.u32 %v77, %v85
    %v94 = vxor.u32 %v78, %v86
    %v95 = vxor.u32 %v79, %v87
    %v96 = vxor.u32 %v80, %v88
    %v97 = vxor.u32 %v81, %v89
    %v98 = vmul.u32 %v90, 2221713035
    %v99 = vmul.u32 %v91, 2221713035
    %v100 = vmul.u32 %v92, 2221713035
    %v101 = vmul.u32 %v93, 2221713035
    %v102 = vmul.u32 %v94, 2221713035
    %v103 = vmul.u32 %v95, 2221713035
    %v104 = vmul.u32 %v96, 2221713035
    %v105 = vmul.u32 %v97, 2221713035
    %v106 = vshrl.u32 %v98, 16
    %v107 = vshrl.u32 %v99, 16
    %v108 = vshrl.u32 %v100, 16
    %v109 = vshrl.u32 %v101, 16
    %v110 = vshrl.u32 %v102, 16
    %v111 = vshrl.u32 %v103, 16
    %v112 = vshrl.u32 %v104, 16
    %v113 = vshrl.u32 %v105, 16
    %v114 = vxor.u32 %v98, %v106
    %v115 = vxor.u32 %v99, %v107
    %v116 = vxor.u32 %v100, %v108
    %v117 = vxor.u32 %v101, %v109
    %v118 = vxor.u32 %v102, %v110
    %v119 = vxor.u32 %v103, %v111
    %v120 = vxor.u32 %v104, %v112
    %v121 = vxor.u32 %v105, %v113
    %s122 = smul.u32 %s47, 2246822519
    %s123 = sadd.s32 %s122, 374761393
    %v124 = vstv %s123
    %v125 = vxor.u32 %v39, %v124
    %v126 = vxor.u32 %v40, %v124
    %v127 = vxor.u32 %v41, %v124
    %v128 = vxor.u32 %v42, %v124
    %v129 = vxor.u32 %v43, %v124
    %v130 = vxor.u32 %v44, %v124
    %v131 = vxor.u32 %v45, %v124
    %v132 = vxor.u32 %v46, %v124
    %v133 = vshrl.u32 %v125, 16
    %v134 = vshrl.u32 %v126, 16
    %v135 = vshrl.u32 %v127, 16
    %v136 = vshrl.u32 %v128, 16
    %v137 = vshrl.u32 %v129, 16
    %v138 = vshrl.u32 %v130, 16
    %v139 = vshrl.u32 %v131, 16
    %v140 = vshrl.u32 %v132, 16
    %v141 = vxor.u32 %v125, %v133
    %v142 = vxor.u32 %v126, %v134
    %v143 = vxor.u32 %v127, %v135
    %v144 = vxor.u32 %v128, %v136
    %v145 = vxor.u32 %v129, %v137
    %v146 = vxor.u32 %v130, %v138
    %v147 = vxor.u32 %v131, %v139
    %v148 = vxor.u32 %v132, %v140
    %v149 = vmul.u32 %v141, 2146121005
    %v150 = vmul.u32 %v142, 2146121005
    %v151 = vmul.u32 %v143, 2146121005
    %v152 = vmul.u32 %v144, 2146121005
    %v153 = vmul.u32 %v145, 2146121005
    %v154 = vmul.u32 %v146, 2146121005
    %v155 = vmul.u32 %v147, 2146121005
    %v156 = vmul.u32 %v148, 2146121005
    %v157 = vshrl.u32 %v149, 15
    %v158 = vshrl.u32 %v150, 15
    %v159 = vshrl.u32 %v151, 15
    %v160 = vshrl.u32 %v152, 15
    %v161 = vshrl.u32 %v153, 15
    %v162 = vshrl.u32 %v154, 15
    %v163 = vshrl.u32 %v155, 15
    %v164 = vshrl.u32 %v156, 15
    %v165 = vxor.u32 %v149, %v157
    %v166 = vxor.u32 %v150, %v158
    %v167 = vxor.u32 %v151, %v159
    %v168 = vxor.u32 %v152, %v160
    %v169 = vxor.u32 %v153, %v161
    %v170 = vxor.u32 %v154, %v162
    %v171 = vxor.u32 %v155, %v163
    %v172 = vxor.u32 %v156, %v164
    %v173 = vmul.u32 %v165, 2221713035
    %v174 = vmul.u32 %v166, 2221713035
    %v175 = vmul.u32 %v167, 2221713035
    %v176 = vmul.u32 %v168, 2221713035
    %v177 = vmul.u32 %v169, 2221713035
    %v178 = vmul.u32 %v170, 2221713035
    %v179 = vmul.u32 %v171, 2221713035
    %v180 = vmul.u32 %v172, 2221713035
    %v181 = vshrl.u32 %v173, 16
    %v182 = vshrl.u32 %v174, 16
    %v183 = vshrl.u32 %v175, 16
    %v184 = vshrl.u32 %v176, 16
    %v185 = vshrl.u32 %v177, 16
    %v186 = vshrl.u32 %v178, 16
    %v187 = vshrl.u32 %v179, 16
    %v188 = vshrl.u32 %v180, 16
    %v189 = vxor.u32 %v173, %v181
    %v190 = vxor.u32 %v174, %v182
    %v191 = vxor.u32 %v175, %v183
    %v192 = vxor.u32 %v176, %v184
    %v193 = vxor.u32 %v177, %v185
    %v194 = vxor.u32 %v178, %v186
    %v195 = vxor.u32 %v179, %v187
    %v196 = vxor.u32 %v180, %v188
    %v197 = vshrl.u32 %v114, 9
    %v198 = vshrl.u32 %v115, 9
    %v199 = vshrl.u32 %v116, 9
    %v200 = vshrl.u32 %v117, 9
    %v201 = vshrl.u32 %v118, 9
    %v202 = vshrl.u32 %v119, 9
    %v203 = vshrl.u32 %v120, 9
    %v204 = vshrl.u32 %v121, 9
    %v205 = vor.u32 %v197, 1065353216
    %v206 = vor.u32 %v198, 1065353216
    %v207 = vor.u32 %v199, 1065353216
    %v208 = vor.u32 %v200, 1065353216
    %v209 = vor.u32 %v201, 1065353216
    %v210 = vor.u32 %v202, 1065353216
    %v211 = vor.u32 %v203, 1065353216
    %v212 = vor.u32 %v204, 1065353216
    %v221 = vshrl.u32 %v189, 9
    %v222 = vshrl.u32 %v190, 9
    %v223 = vshrl.u32 %v191, 9
    %v224 = vshrl.u32 %v192, 9
    %v225 = vshrl.u32 %v193, 9
    %v226 = vshrl.u32 %v194, 9
    %v227 = vshrl.u32 %v195, 9
    %v228 = vshrl.u32 %v196, 9
    %v229 = vor.u32 %v221, 1065353216
    %v230 = vor.u32 %v222, 1065353216
    %v231 = vor.u32 %v223, 1065353216
    %v232 = vor.u32 %v224, 1065353216
    %v233 = vor.u32 %v225, 1065353216
    %v234 = vor.u32 %v226, 1065353216
    %v235 = vor.u32 %v227, 1065353216
    %v236 = vor.u32 %v228, 1065353216
    %v245 = vsub.f32 2.0, %v205
    %v246 = vsub.f32 2.0, %v206
    %v247 = vsub.f32 2.0, %v207
    %v248 = vsub.f32 2.0, %v208
    %v249 = vsub.f32 2.0, %v209
    %v250 = vsub.f32 2.0, %v210
    %v251 = vsub.f32 2.0, %v211
    %v252 = vsub.f32 2.0, %v212
    %v253 = vsub.f32 %v229, 1.0
    %v254 = vsub.f32 %v230, 1.0
    %v255 = vsub.f32 %v231, 1.0
    %v256 = vsub.f32 %v232, 1.0
    %v257 = vsub.f32 %v233, 1.0
    %v258 = vsub.f32 %v234, 1.0
    %v259 = vsub.f32 %v235, 1.0
    %v260 = vsub.f32 %v236, 1.0
    %v261 = vlog2.pop %v245
    %v262 = vmul.f32 %v261, 0.6931472
    %v263 = vlog2.pop %v246
    %v264 = vmul.f32 %v263, 0.6931472
    %v265 = vlog2.pop %v247
    %v266 = vmul.f32 %v265, 0.6931472
    %v267 = vlog2.pop %v248
    %v268 = vmul.f32 %v267, 0.6931472
    %v269 = vlog2.pop %v249
    %v270 = vmul.f32 %v269, 0.6931472
    %v271 = vlog2.pop %v250
    %v272 = vmul.f32 %v271, 0.6931472
    %v273 = vlog2.pop %v251
    %v274 = vmul.f32 %v273, 0.6931472
    %v275 = vlog2.pop %v252
    %v276 = vmul.f32 %v275, 0.6931472
    %v277 = vmul.f32 %v262, -2.0
    %v278 = vmul.f32 %v264, -2.0
    %v279 = vmul.f32 %v266, -2.0
    %v280 = vmul.f32 %v268, -2.0
    %v281 = vmul.f32 %v270, -2.0
    %v282 = vmul.f32 %v272, -2.0
    %v283 = vmul.f32 %v274, -2.0
    %v284 = vmul.f32 %v276, -2.0
    %v285 = vrsqrt.pop %v277
    %v286 = vmul.f32 %v277, %v285
    %vm287 = vcmp.eq.f32.partialorder %v277, inf
    %v288 = vsel %vm287, %v277, %v286
    %vm289 = vcmp.eq.f32.partialorder %v277, 0.0
    %v290 = vand.u32 %v277, 2147483648
    %v291 = vsel %vm289, %v290, %v288
    %v292 = vrsqrt.pop %v278
    %v293 = vmul.f32 %v278, %v292
    %vm294 = vcmp.eq.f32.partialorder %v278, inf
    %v295 = vsel %vm294, %v278, %v293
    %vm296 = vcmp.eq.f32.partialorder %v278, 0.0
    %v297 = vand.u32 %v278, 2147483648
    %v298 = vsel %vm296, %v297, %v295
    %v299 = vrsqrt.pop %v279
    %v300 = vmul.f32 %v279, %v299
    %vm301 = vcmp.eq.f32.partialorder %v279, inf
    %v302 = vsel %vm301, %v279, %v300
    %vm303 = vcmp.eq.f32.partialorder %v279, 0.0
    %v304 = vand.u32 %v279, 2147483648
    %v305 = vsel %vm303, %v304, %v302
    %v306 = vrsqrt.pop %v280
    %v307 = vmul.f32 %v280, %v306
    %vm308 = vcmp.eq.f32.partialorder %v280, inf
    %v309 = vsel %vm308, %v280, %v307
    %vm310 = vcmp.eq.f32.partialorder %v280, 0.0
    %v311 = vand.u32 %v280, 2147483648
    %v312 = vsel %vm310, %v311, %v309
    %v313 = vrsqrt.pop %v281
    %v314 = vmul.f32 %v281, %v313
    %vm315 = vcmp.eq.f32.partialorder %v281, inf
    %v316 = vsel %vm315, %v281, %v314
    %vm317 = vcmp.eq.f32.partialorder %v281, 0.0
    %v318 = vand.u32 %v281, 2147483648
    %v319 = vsel %vm317, %v318, %v316
    %v320 = vrsqrt.pop %v282
    %v321 = vmul.f32 %v282, %v320
    %vm322 = vcmp.eq.f32.partialorder %v282, inf
    %v323 = vsel %vm322, %v282, %v321
    %vm324 = vcmp.eq.f32.partialorder %v282, 0.0
    %v325 = vand.u32 %v282, 2147483648
    %v326 = vsel %vm324, %v325, %v323
    %v327 = vrsqrt.pop %v283
    %v328 = vmul.f32 %v283, %v327
    %vm329 = vcmp.eq.f32.partialorder %v283, inf
    %v330 = vsel %vm329, %v283, %v328
    %vm331 = vcmp.eq.f32.partialorder %v283, 0.0
    %v332 = vand.u32 %v283, 2147483648
    %v333 = vsel %vm331, %v332, %v330
    %v334 = vrsqrt.pop %v284
    %v335 = vmul.f32 %v284, %v334
    %vm336 = vcmp.eq.f32.partialorder %v284, inf
    %v337 = vsel %vm336, %v284, %v335
    %vm338 = vcmp.eq.f32.partialorder %v284, 0.0
    %v339 = vand.u32 %v284, 2147483648
    %v340 = vsel %vm338, %v339, %v337
    %v341 = vmul.f32 %v253, 6.2831855
    %v342 = vmul.f32 %v254, 6.2831855
    %v343 = vmul.f32 %v255, 6.2831855
    %v344 = vmul.f32 %v256, 6.2831855
    %v345 = vmul.f32 %v257, 6.2831855
    %v346 = vmul.f32 %v258, 6.2831855
    %v347 = vmul.f32 %v259, 6.2831855
    %v348 = vmul.f32 %v260, 6.2831855
    %v349 = vand.u32 2147483647, %v341
    %vm350 = vcmp.le.f32.partialorder %v349, 0.7853982
    %vm351 = vcmp.lt.s32.totalorder %v341, 0
    %v352 = vand.u32 %v341, 2139095040
    %v353 = vshrl.u32 %v352, 23
    %v354 = vsub.s32 %v353, 127
    %v355 = vand.u32 2147483647, %v341
    %v356 = vand.u32 %v355, 8388607
    %v357 = vor.u32 %v356, 8388608
    %v358 = vsub.s32 0, %v357
    %v359 = vadd.s32 %v354, 1
    %vm360 = vcmp.gt.s32.totalorder %v359, 0
    %v361 = vsel %vm360, %v359, 0
    %v362 = vshrl.u32 %v361, 5
    %v363 = vand.u32 %v361, 31
    %v364 = vsub.s32 32, %v363
    %v365 = vshrl.u32 683565275, %v364
    %v366 = vshll.u32 683565275, %v363
    %v367 = vshrl.u32 2475754826, %v364
    %v368 = vor.u32 %v366, %v367
    %v369 = vshll.u32 2475754826, %v363
    %v370 = vshrl.u32 2131351028, %v364
    %v371 = vor.u32 %v369, %v370
    %v372 = vshll.u32 2131351028, %v363
    %v373 = vshrl.u32 2102212464, %v364
    %v374 = vor.u32 %v372, %v373
    %v375 = vshll.u32 2102212464, %v363
    %v376 = vshrl.u32 920167782, %v364
    %v377 = vor.u32 %v375, %v376
    %v378 = vshll.u32 920167782, %v363
    %v379 = vshrl.u32 1326507024, %v364
    %v380 = vor.u32 %v378, %v379
    %vm381 = vcmp.lt.s32.totalorder %v362, 1
    %vm382 = vcmp.lt.s32.totalorder %v362, 2
    %vm383 = vcmp.lt.s32.totalorder %v362, 3
    %vm384 = vcmp.lt.s32.totalorder %v362, 4
    %v385 = vsel %vm381, %v365, %v368
    %v386 = vsel %vm384, %v374, 2102212464
    %v387 = vsel %vm383, %v371, %v386
    %v388 = vsel %vm382, %v385, %v387
    %v389 = vsel %vm381, %v368, %v371
    %v390 = vsel %vm384, %v377, 920167782
    %v391 = vsel %vm383, %v374, %v390
    %v392 = vsel %vm382, %v389, %v391
    %v393 = vsel %vm381, %v371, %v374
    %v394 = vsel %vm384, %v380, 1326507024
    %v395 = vsel %vm383, %v377, %v394
    %v396 = vsel %vm382, %v393, %v395
    %v397 = vshll.u32 %v357, 8
    %v398 = vmul.u32.u64.compose %v397, %v396
    %v399 = vextract.low.u32 %v398
    %v400 = vextract.high.u32 %v398
    %v401 = vmul.u32.u64.compose %v397, %v392
    %v402 = vextract.low.u32 %v401
    %v403 = vextract.high.u32 %v401
    %v404 = vmul.u32 %v397, %v388
    %v405 = vadd.s32 %v400, %v402
    %vm406 = vc.u32 %v400, %v402
    %v407 = vadd.s32 %v403, 1
    %v408 = vsel %vm406, %v407, %v403
    %v409 = vadd.s32 %v404, %v408
    %v410 = vadd.s32 %v409, 536870912
    %v411 = vshrl.u32 %v410, 30
    %v412 = vshll.u32 %v411, 30
    %v413 = vsub.s32 %v409, %v412
    %vm414 = vcmp.lt.s32.totalorder %v413, 0
    %v415 = vsub.s32 0, %v413
    %v416 = vsel %vm414, %v415, %v413
    %v417 = vclz %v416
    %v418 = vsub.s32 %v417, 2
    %vm419 = vcmp.gt.s32.totalorder 0, %v418
    %v420 = vsel %vm419, 0, %v418
    %v421 = vsub.s32 32, %v420
    %v422 = vshll.u32 %v413, %v420
    %v423 = vshrl.u32 %v405, %v421
    %v424 = vor.u32 %v422, %v423
    %v425 = vsub.s32 4294967266, %v420
    %v426 = vadd.s32 %v425, 127
    %v427 = vshll.u32 %v426, 23
    %v428 = vor.u32 4788187, %v427
    %v429 = vand.u32 2147483647, %v428
    %v431 = vcvt.s32.f32 %v424
    %v432 = vmul.f32 %v431, %v429
    %v433 = vxor.u32 %v432, 2147483648
    %v434 = vsel %vm351, %v433, %v432
    %v435 = vsub.s32 4, %v411
    %v436 = vsel %vm351, %v435, %v411
    %v437 = vsel %vm350, %v341, %v434
    %v438 = vsel %vm350, 0, %v436
    %v439 = vcosq.f32.pop %v437
    %v440 = vsinq.f32.pop %v437
    %vm441 = vweird.f32 %v341
    %v442 = vand.u32 %v438, 3
    %vm443 = vcmp.lt.s32.totalorder %v442, 2
    %vm444 = vcmp.eq.s32.totalorder %v442, 0
    %v445 = vxor.u32 %v440, 2147483648
    %v446 = vsel %vm444, %v439, %v445
    %vm447 = vcmp.eq.s32.totalorder %v442, 2
    %v448 = vxor.u32 %v439, 2147483648
    %v449 = vsel %vm447, %v448, %v440
    %v450 = vsel %vm443, %v446, %v449
    %v451 = vsel %vm441, nan, %v450
    %v452 = vand.u32 2147483647, %v342
    %vm453 = vcmp.le.f32.partialorder %v452, 0.7853982
    %vm454 = vcmp.lt.s32.totalorder %v342, 0
    %v455 = vand.u32 %v342, 2139095040
    %v456 = vshrl.u32 %v455, 23
    %v457 = vsub.s32 %v456, 127
    %v458 = vand.u32 2147483647, %v342
    %v459 = vand.u32 %v458, 8388607
    %v460 = vor.u32 %v459, 8388608
    %v461 = vsub.s32 0, %v460
    %v462 = vadd.s32 %v457, 1
    %vm463 = vcmp.gt.s32.totalorder %v462, 0
    %v464 = vsel %vm463, %v462, 0
    %v465 = vshrl.u32 %v464, 5
    %v466 = vand.u32 %v464, 31
    %v467 = vsub.s32 32, %v466
    %v468 = vshrl.u32 683565275, %v467
    %v469 = vshll.u32 683565275, %v466
    %v470 = vshrl.u32 2475754826, %v467
    %v471 = vor.u32 %v469, %v470
    %v472 = vshll.u32 2475754826, %v466
    %v473 = vshrl.u32 2131351028, %v467
    %v474 = vor.u32 %v472, %v473
    %v475 = vshll.u32 2131351028, %v466
    %v476 = vshrl.u32 2102212464, %v467
    %v477 = vor.u32 %v475, %v476
    %v478 = vshll.u32 2102212464, %v466
    %v479 = vshrl.u32 920167782, %v467
    %v480 = vor.u32 %v478, %v479
    %v481 = vshll.u32 920167782, %v466
    %v482 = vshrl.u32 1326507024, %v467
    %v483 = vor.u32 %v481, %v482
    %vm484 = vcmp.lt.s32.totalorder %v465, 1
    %vm485 = vcmp.lt.s32.totalorder %v465, 2
    %vm486 = vcmp.lt.s32.totalorder %v465, 3
    %vm487 = vcmp.lt.s32.totalorder %v465, 4
    %v488 = vsel %vm484, %v468, %v471
    %v489 = vsel %vm487, %v477, 2102212464
    %v490 = vsel %vm486, %v474, %v489
    %v491 = vsel %vm485, %v488, %v490
    %v492 = vsel %vm484, %v471, %v474
    %v493 = vsel %vm487, %v480, 920167782
    %v494 = vsel %vm486, %v477, %v493
    %v495 = vsel %vm485, %v492, %v494
    %v496 = vsel %vm484, %v474, %v477
    %v497 = vsel %vm487, %v483, 1326507024
    %v498 = vsel %vm486, %v480, %v497
    %v499 = vsel %vm485, %v496, %v498
    %v500 = vshll.u32 %v460, 8
    %v501 = vmul.u32.u64.compose %v500, %v499
    %v502 = vextract.low.u32 %v501
    %v503 = vextract.high.u32 %v501
    %v504 = vmul.u32.u64.compose %v500, %v495
    %v505 = vextract.low.u32 %v504
    %v506 = vextract.high.u32 %v504
    %v507 = vmul.u32 %v500, %v491
    %v508 = vadd.s32 %v503, %v505
    %vm509 = vc.u32 %v503, %v505
    %v510 = vadd.s32 %v506, 1
    %v511 = vsel %vm509, %v510, %v506
    %v512 = vadd.s32 %v507, %v511
    %v513 = vadd.s32 %v512, 536870912
    %v514 = vshrl.u32 %v513, 30
    %v515 = vshll.u32 %v514, 30
    %v516 = vsub.s32 %v512, %v515
    %vm517 = vcmp.lt.s32.totalorder %v516, 0
    %v518 = vsub.s32 0, %v516
    %v519 = vsel %vm517, %v518, %v516
    %v520 = vclz %v519
    %v521 = vsub.s32 %v520, 2
    %vm522 = vcmp.gt.s32.totalorder 0, %v521
    %v523 = vsel %vm522, 0, %v521
    %v524 = vsub.s32 32, %v523
    %v525 = vshll.u32 %v516, %v523
    %v526 = vshrl.u32 %v508, %v524
    %v527 = vor.u32 %v525, %v526
    %v528 = vsub.s32 4294967266, %v523
    %v529 = vadd.s32 %v528, 127
    %v530 = vshll.u32 %v529, 23
    %v531 = vor.u32 4788187, %v530
    %v532 = vand.u32 2147483647, %v531
    %v534 = vcvt.s32.f32 %v527
    %v535 = vmul.f32 %v534, %v532
    %v536 = vxor.u32 %v535, 2147483648
    %v537 = vsel %vm454, %v536, %v535
    %v538 = vsub.s32 4, %v514
    %v539 = vsel %vm454, %v538, %v514
    %v540 = vsel %vm453, %v342, %v537
    %v541 = vsel %vm453, 0, %v539
    %v542 = vcosq.f32.pop %v540
    %v543 = vsinq.f32.pop %v540
    %vm544 = vweird.f32 %v342
    %v545 = vand.u32 %v541, 3
    %vm546 = vcmp.lt.s32.totalorder %v545, 2
    %vm547 = vcmp.eq.s32.totalorder %v545, 0
    %v548 = vxor.u32 %v543, 2147483648
    %v549 = vsel %vm547, %v542, %v548
    %vm550 = vcmp.eq.s32.totalorder %v545, 2
    %v551 = vxor.u32 %v542, 2147483648
    %v552 = vsel %vm550, %v551, %v543
    %v553 = vsel %vm546, %v549, %v552
    %v554 = vsel %vm544, nan, %v553
    %v555 = vand.u32 2147483647, %v343
    %vm556 = vcmp.le.f32.partialorder %v555, 0.7853982
    %vm557 = vcmp.lt.s32.totalorder %v343, 0
    %v558 = vand.u32 %v343, 2139095040
    %v559 = vshrl.u32 %v558, 23
    %v560 = vsub.s32 %v559, 127
    %v561 = vand.u32 2147483647, %v343
    %v562 = vand.u32 %v561, 8388607
    %v563 = vor.u32 %v562, 8388608
    %v564 = vsub.s32 0, %v563
    %v565 = vadd.s32 %v560, 1
    %vm566 = vcmp.gt.s32.totalorder %v565, 0
    %v567 = vsel %vm566, %v565, 0
    %v568 = vshrl.u32 %v567, 5
    %v569 = vand.u32 %v567, 31
    %v570 = vsub.s32 32, %v569
    %v571 = vshrl.u32 683565275, %v570
    %v572 = vshll.u32 683565275, %v569
    %v573 = vshrl.u32 2475754826, %v570
    %v574 = vor.u32 %v572, %v573
    %v575 = vshll.u32 2475754826, %v569
    %v576 = vshrl.u32 2131351028, %v570
    %v577 = vor.u32 %v575, %v576
    %v578 = vshll.u32 2131351028, %v569
    %v579 = vshrl.u32 2102212464, %v570
    %v580 = vor.u32 %v578, %v579
    %v581 = vshll.u32 2102212464, %v569
    %v582 = vshrl.u32 920167782, %v570
    %v583 = vor.u32 %v581, %v582
    %v584 = vshll.u32 920167782, %v569
    %v585 = vshrl.u32 1326507024, %v570
    %v586 = vor.u32 %v584, %v585
    %vm587 = vcmp.lt.s32.totalorder %v568, 1
    %vm588 = vcmp.lt.s32.totalorder %v568, 2
    %vm589 = vcmp.lt.s32.totalorder %v568, 3
    %vm590 = vcmp.lt.s32.totalorder %v568, 4
    %v591 = vsel %vm587, %v571, %v574
    %v592 = vsel %vm590, %v580, 2102212464
    %v593 = vsel %vm589, %v577, %v592
    %v594 = vsel %vm588, %v591, %v593
    %v595 = vsel %vm587, %v574, %v577
    %v596 = vsel %vm590, %v583, 920167782
    %v597 = vsel %vm589, %v580, %v596
    %v598 = vsel %vm588, %v595, %v597
    %v599 = vsel %vm587, %v577, %v580
    %v600 = vsel %vm590, %v586, 1326507024
    %v601 = vsel %vm589, %v583, %v600
    %v602 = vsel %vm588, %v599, %v601
    %v603 = vshll.u32 %v563, 8
    %v604 = vmul.u32.u64.compose %v603, %v602
    %v605 = vextract.low.u32 %v604
    %v606 = vextract.high.u32 %v604
    %v607 = vmul.u32.u64.compose %v603, %v598
    %v608 = vextract.low.u32 %v607
    %v609 = vextract.high.u32 %v607
    %v610 = vmul.u32 %v603, %v594
    %v611 = vadd.s32 %v606, %v608
    %vm612 = vc.u32 %v606, %v608
    %v613 = vadd.s32 %v609, 1
    %v614 = vsel %vm612, %v613, %v609
    %v615 = vadd.s32 %v610, %v614
    %v616 = vadd.s32 %v615, 536870912
    %v617 = vshrl.u32 %v616, 30
    %v618 = vshll.u32 %v617, 30
    %v619 = vsub.s32 %v615, %v618
    %vm620 = vcmp.lt.s32.totalorder %v619, 0
    %v621 = vsub.s32 0, %v619
    %v622 = vsel %vm620, %v621, %v619
    %v623 = vclz %v622
    %v624 = vsub.s32 %v623, 2
    %vm625 = vcmp.gt.s32.totalorder 0, %v624
    %v626 = vsel %vm625, 0, %v624
    %v627 = vsub.s32 32, %v626
    %v628 = vshll.u32 %v619, %v626
    %v629 = vshrl.u32 %v611, %v627
    %v630 = vor.u32 %v628, %v629
    %v631 = vsub.s32 4294967266, %v626
    %v632 = vadd.s32 %v631, 127
    %v633 = vshll.u32 %v632, 23
    %v634 = vor.u32 4788187, %v633
    %v635 = vand.u32 2147483647, %v634
    %v637 = vcvt.s32.f32 %v630
    %v638 = vmul.f32 %v637, %v635
    %v639 = vxor.u32 %v638, 2147483648
    %v640 = vsel %vm557, %v639, %v638
    %v641 = vsub.s32 4, %v617
    %v642 = vsel %vm557, %v641, %v617
    %v643 = vsel %vm556, %v343, %v640
    %v644 = vsel %vm556, 0, %v642
    %v645 = vcosq.f32.pop %v643
    %v646 = vsinq.f32.pop %v643
    %vm647 = vweird.f32 %v343
    %v648 = vand.u32 %v644, 3
    %vm649 = vcmp.lt.s32.totalorder %v648, 2
    %vm650 = vcmp.eq.s32.totalorder %v648, 0
    %v651 = vxor.u32 %v646, 2147483648
    %v652 = vsel %vm650, %v645, %v651
    %vm653 = vcmp.eq.s32.totalorder %v648, 2
    %v654 = vxor.u32 %v645, 2147483648
    %v655 = vsel %vm653, %v654, %v646
    %v656 = vsel %vm649, %v652, %v655
    %v657 = vsel %vm647, nan, %v656
    %v658 = vand.u32 2147483647, %v344
    %vm659 = vcmp.le.f32.partialorder %v658, 0.7853982
    %vm660 = vcmp.lt.s32.totalorder %v344, 0
    %v661 = vand.u32 %v344, 2139095040
    %v662 = vshrl.u32 %v661, 23
    %v663 = vsub.s32 %v662, 127
    %v664 = vand.u32 2147483647, %v344
    %v665 = vand.u32 %v664, 8388607
    %v666 = vor.u32 %v665, 8388608
    %v667 = vsub.s32 0, %v666
    %v668 = vadd.s32 %v663, 1
    %vm669 = vcmp.gt.s32.totalorder %v668, 0
    %v670 = vsel %vm669, %v668, 0
    %v671 = vshrl.u32 %v670, 5
    %v672 = vand.u32 %v670, 31
    %v673 = vsub.s32 32, %v672
    %v674 = vshrl.u32 683565275, %v673
    %v675 = vshll.u32 683565275, %v672
    %v676 = vshrl.u32 2475754826, %v673
    %v677 = vor.u32 %v675, %v676
    %v678 = vshll.u32 2475754826, %v672
    %v679 = vshrl.u32 2131351028, %v673
    %v680 = vor.u32 %v678, %v679
    %v681 = vshll.u32 2131351028, %v672
    %v682 = vshrl.u32 2102212464, %v673
    %v683 = vor.u32 %v681, %v682
    %v684 = vshll.u32 2102212464, %v672
    %v685 = vshrl.u32 920167782, %v673
    %v686 = vor.u32 %v684, %v685
    %v687 = vshll.u32 920167782, %v672
    %v688 = vshrl.u32 1326507024, %v673
    %v689 = vor.u32 %v687, %v688
    %vm690 = vcmp.lt.s32.totalorder %v671, 1
    %vm691 = vcmp.lt.s32.totalorder %v671, 2
    %vm692 = vcmp.lt.s32.totalorder %v671, 3
    %vm693 = vcmp.lt.s32.totalorder %v671, 4
    %v694 = vsel %vm690, %v674, %v677
    %v695 = vsel %vm693, %v683, 2102212464
    %v696 = vsel %vm692, %v680, %v695
    %v697 = vsel %vm691, %v694, %v696
    %v698 = vsel %vm690, %v677, %v680
    %v699 = vsel %vm693, %v686, 920167782
    %v700 = vsel %vm692, %v683, %v699
    %v701 = vsel %vm691, %v698, %v700
    %v702 = vsel %vm690, %v680, %v683
    %v703 = vsel %vm693, %v689, 1326507024
    %v704 = vsel %vm692, %v686, %v703
    %v705 = vsel %vm691, %v702, %v704
    %v706 = vshll.u32 %v666, 8
    %v707 = vmul.u32.u64.compose %v706, %v705
    %v708 = vextract.low.u32 %v707
    %v709 = vextract.high.u32 %v707
    %v710 = vmul.u32.u64.compose %v706, %v701
    %v711 = vextract.low.u32 %v710
    %v712 = vextract.high.u32 %v710
    %v713 = vmul.u32 %v706, %v697
    %v714 = vadd.s32 %v709, %v711
    %vm715 = vc.u32 %v709, %v711
    %v716 = vadd.s32 %v712, 1
    %v717 = vsel %vm715, %v716, %v712
    %v718 = vadd.s32 %v713, %v717
    %v719 = vadd.s32 %v718, 536870912
    %v720 = vshrl.u32 %v719, 30
    %v721 = vshll.u32 %v720, 30
    %v722 = vsub.s32 %v718, %v721
    %vm723 = vcmp.lt.s32.totalorder %v722, 0
    %v724 = vsub.s32 0, %v722
    %v725 = vsel %vm723, %v724, %v722
    %v726 = vclz %v725
    %v727 = vsub.s32 %v726, 2
    %vm728 = vcmp.gt.s32.totalorder 0, %v727
    %v729 = vsel %vm728, 0, %v727
    %v730 = vsub.s32 32, %v729
    %v731 = vshll.u32 %v722, %v729
    %v732 = vshrl.u32 %v714, %v730
    %v733 = vor.u32 %v731, %v732
    %v734 = vsub.s32 4294967266, %v729
    %v735 = vadd.s32 %v734, 127
    %v736 = vshll.u32 %v735, 23
    %v737 = vor.u32 4788187, %v736
    %v738 = vand.u32 2147483647, %v737
    %v740 = vcvt.s32.f32 %v733
    %v741 = vmul.f32 %v740, %v738
    %v742 = vxor.u32 %v741, 2147483648
    %v743 = vsel %vm660, %v742, %v741
    %v744 = vsub.s32 4, %v720
    %v745 = vsel %vm660, %v744, %v720
    %v746 = vsel %vm659, %v344, %v743
    %v747 = vsel %vm659, 0, %v745
    %v748 = vcosq.f32.pop %v746
    %v749 = vsinq.f32.pop %v746
    %vm750 = vweird.f32 %v344
    %v751 = vand.u32 %v747, 3
    %vm752 = vcmp.lt.s32.totalorder %v751, 2
    %vm753 = vcmp.eq.s32.totalorder %v751, 0
    %v754 = vxor.u32 %v749, 2147483648
    %v755 = vsel %vm753, %v748, %v754
    %vm756 = vcmp.eq.s32.totalorder %v751, 2
    %v757 = vxor.u32 %v748, 2147483648
    %v758 = vsel %vm756, %v757, %v749
    %v759 = vsel %vm752, %v755, %v758
    %v760 = vsel %vm750, nan, %v759
    %v761 = vand.u32 2147483647, %v345
    %vm762 = vcmp.le.f32.partialorder %v761, 0.7853982
    %vm763 = vcmp.lt.s32.totalorder %v345, 0
    %v764 = vand.u32 %v345, 2139095040
    %v765 = vshrl.u32 %v764, 23
    %v766 = vsub.s32 %v765, 127
    %v767 = vand.u32 2147483647, %v345
    %v768 = vand.u32 %v767, 8388607
    %v769 = vor.u32 %v768, 8388608
    %v770 = vsub.s32 0, %v769
    %v771 = vadd.s32 %v766, 1
    %vm772 = vcmp.gt.s32.totalorder %v771, 0
    %v773 = vsel %vm772, %v771, 0
    %v774 = vshrl.u32 %v773, 5
    %v775 = vand.u32 %v773, 31
    %v776 = vsub.s32 32, %v775
    %v777 = vshrl.u32 683565275, %v776
    %v778 = vshll.u32 683565275, %v775
    %v779 = vshrl.u32 2475754826, %v776
    %v780 = vor.u32 %v778, %v779
    %v781 = vshll.u32 2475754826, %v775
    %v782 = vshrl.u32 2131351028, %v776
    %v783 = vor.u32 %v781, %v782
    %v784 = vshll.u32 2131351028, %v775
    %v785 = vshrl.u32 2102212464, %v776
    %v786 = vor.u32 %v784, %v785
    %v787 = vshll.u32 2102212464, %v775
    %v788 = vshrl.u32 920167782, %v776
    %v789 = vor.u32 %v787, %v788
    %v790 = vshll.u32 920167782, %v775
    %v791 = vshrl.u32 1326507024, %v776
    %v792 = vor.u32 %v790, %v791
    %vm793 = vcmp.lt.s32.totalorder %v774, 1
    %vm794 = vcmp.lt.s32.totalorder %v774, 2
    %vm795 = vcmp.lt.s32.totalorder %v774, 3
    %vm796 = vcmp.lt.s32.totalorder %v774, 4
    %v797 = vsel %vm793, %v777, %v780
    %v798 = vsel %vm796, %v786, 2102212464
    %v799 = vsel %vm795, %v783, %v798
    %v800 = vsel %vm794, %v797, %v799
    %v801 = vsel %vm793, %v780, %v783
    %v802 = vsel %vm796, %v789, 920167782
    %v803 = vsel %vm795, %v786, %v802
    %v804 = vsel %vm794, %v801, %v803
    %v805 = vsel %vm793, %v783, %v786
    %v806 = vsel %vm796, %v792, 1326507024
    %v807 = vsel %vm795, %v789, %v806
    %v808 = vsel %vm794, %v805, %v807
    %v809 = vshll.u32 %v769, 8
    %v810 = vmul.u32.u64.compose %v809, %v808
    %v811 = vextract.low.u32 %v810
    %v812 = vextract.high.u32 %v810
    %v813 = vmul.u32.u64.compose %v809, %v804
    %v814 = vextract.low.u32 %v813
    %v815 = vextract.high.u32 %v813
    %v816 = vmul.u32 %v809, %v800
    %v817 = vadd.s32 %v812, %v814
    %vm818 = vc.u32 %v812, %v814
    %v819 = vadd.s32 %v815, 1
    %v820 = vsel %vm818, %v819, %v815
    %v821 = vadd.s32 %v816, %v820
    %v822 = vadd.s32 %v821, 536870912
    %v823 = vshrl.u32 %v822, 30
    %v824 = vshll.u32 %v823, 30
    %v825 = vsub.s32 %v821, %v824
    %vm826 = vcmp.lt.s32.totalorder %v825, 0
    %v827 = vsub.s32 0, %v825
    %v828 = vsel %vm826, %v827, %v825
    %v829 = vclz %v828
    %v830 = vsub.s32 %v829, 2
    %vm831 = vcmp.gt.s32.totalorder 0, %v830
    %v832 = vsel %vm831, 0, %v830
    %v833 = vsub.s32 32, %v832
    %v834 = vshll.u32 %v825, %v832
    %v835 = vshrl.u32 %v817, %v833
    %v836 = vor.u32 %v834, %v835
    %v837 = vsub.s32 4294967266, %v832
    %v838 = vadd.s32 %v837, 127
    %v839 = vshll.u32 %v838, 23
    %v840 = vor.u32 4788187, %v839
    %v841 = vand.u32 2147483647, %v840
    %v843 = vcvt.s32.f32 %v836
    %v844 = vmul.f32 %v843, %v841
    %v845 = vxor.u32 %v844, 2147483648
    %v846 = vsel %vm763, %v845, %v844
    %v847 = vsub.s32 4, %v823
    %v848 = vsel %vm763, %v847, %v823
    %v849 = vsel %vm762, %v345, %v846
    %v850 = vsel %vm762, 0, %v848
    %v851 = vcosq.f32.pop %v849
    %v852 = vsinq.f32.pop %v849
    %vm853 = vweird.f32 %v345
    %v854 = vand.u32 %v850, 3
    %vm855 = vcmp.lt.s32.totalorder %v854, 2
    %vm856 = vcmp.eq.s32.totalorder %v854, 0
    %v857 = vxor.u32 %v852, 2147483648
    %v858 = vsel %vm856, %v851, %v857
    %vm859 = vcmp.eq.s32.totalorder %v854, 2
    %v860 = vxor.u32 %v851, 2147483648
    %v861 = vsel %vm859, %v860, %v852
    %v862 = vsel %vm855, %v858, %v861
    %v863 = vsel %vm853, nan, %v862
    %v864 = vand.u32 2147483647, %v346
    %vm865 = vcmp.le.f32.partialorder %v864, 0.7853982
    %vm866 = vcmp.lt.s32.totalorder %v346, 0
    %v867 = vand.u32 %v346, 2139095040
    %v868 = vshrl.u32 %v867, 23
    %v869 = vsub.s32 %v868, 127
    %v870 = vand.u32 2147483647, %v346
    %v871 = vand.u32 %v870, 8388607
    %v872 = vor.u32 %v871, 8388608
    %v873 = vsub.s32 0, %v872
    %v874 = vadd.s32 %v869, 1
    %vm875 = vcmp.gt.s32.totalorder %v874, 0
    %v876 = vsel %vm875, %v874, 0
    %v877 = vshrl.u32 %v876, 5
    %v878 = vand.u32 %v876, 31
    %v879 = vsub.s32 32, %v878
    %v880 = vshrl.u32 683565275, %v879
    %v881 = vshll.u32 683565275, %v878
    %v882 = vshrl.u32 2475754826, %v879
    %v883 = vor.u32 %v881, %v882
    %v884 = vshll.u32 2475754826, %v878
    %v885 = vshrl.u32 2131351028, %v879
    %v886 = vor.u32 %v884, %v885
    %v887 = vshll.u32 2131351028, %v878
    %v888 = vshrl.u32 2102212464, %v879
    %v889 = vor.u32 %v887, %v888
    %v890 = vshll.u32 2102212464, %v878
    %v891 = vshrl.u32 920167782, %v879
    %v892 = vor.u32 %v890, %v891
    %v893 = vshll.u32 920167782, %v878
    %v894 = vshrl.u32 1326507024, %v879
    %v895 = vor.u32 %v893, %v894
    %vm896 = vcmp.lt.s32.totalorder %v877, 1
    %vm897 = vcmp.lt.s32.totalorder %v877, 2
    %vm898 = vcmp.lt.s32.totalorder %v877, 3
    %vm899 = vcmp.lt.s32.totalorder %v877, 4
    %v900 = vsel %vm896, %v880, %v883
    %v901 = vsel %vm899, %v889, 2102212464
    %v902 = vsel %vm898, %v886, %v901
    %v903 = vsel %vm897, %v900, %v902
    %v904 = vsel %vm896, %v883, %v886
    %v905 = vsel %vm899, %v892, 920167782
    %v906 = vsel %vm898, %v889, %v905
    %v907 = vsel %vm897, %v904, %v906
    %v908 = vsel %vm896, %v886, %v889
    %v909 = vsel %vm899, %v895, 1326507024
    %v910 = vsel %vm898, %v892, %v909
    %v911 = vsel %vm897, %v908, %v910
    %v912 = vshll.u32 %v872, 8
    %v913 = vmul.u32.u64.compose %v912, %v911
    %v914 = vextract.low.u32 %v913
    %v915 = vextract.high.u32 %v913
    %v916 = vmul.u32.u64.compose %v912, %v907
    %v917 = vextract.low.u32 %v916
    %v918 = vextract.high.u32 %v916
    %v919 = vmul.u32 %v912, %v903
    %v920 = vadd.s32 %v915, %v917
    %vm921 = vc.u32 %v915, %v917
    %v922 = vadd.s32 %v918, 1
    %v923 = vsel %vm921, %v922, %v918
    %v924 = vadd.s32 %v919, %v923
    %v925 = vadd.s32 %v924, 536870912
    %v926 = vshrl.u32 %v925, 30
    %v927 = vshll.u32 %v926, 30
    %v928 = vsub.s32 %v924, %v927
    %vm929 = vcmp.lt.s32.totalorder %v928, 0
    %v930 = vsub.s32 0, %v928
    %v931 = vsel %vm929, %v930, %v928
    %v932 = vclz %v931
    %v933 = vsub.s32 %v932, 2
    %vm934 = vcmp.gt.s32.totalorder 0, %v933
    %v935 = vsel %vm934, 0, %v933
    %v936 = vsub.s32 32, %v935
    %v937 = vshll.u32 %v928, %v935
    %v938 = vshrl.u32 %v920, %v936
    %v939 = vor.u32 %v937, %v938
    %v940 = vsub.s32 4294967266, %v935
    %v941 = vadd.s32 %v940, 127
    %v942 = vshll.u32 %v941, 23
    %v943 = vor.u32 4788187, %v942
    %v944 = vand.u32 2147483647, %v943
    %v946 = vcvt.s32.f32 %v939
    %v947 = vmul.f32 %v946, %v944
    %v948 = vxor.u32 %v947, 2147483648
    %v949 = vsel %vm866, %v948, %v947
    %v950 = vsub.s32 4, %v926
    %v951 = vsel %vm866, %v950, %v926
    %v952 = vsel %vm865, %v346, %v949
    %v953 = vsel %vm865, 0, %v951
    %v954 = vcosq.f32.pop %v952
    %v955 = vsinq.f32.pop %v952
    %vm956 = vweird.f32 %v346
    %v957 = vand.u32 %v953, 3
    %vm958 = vcmp.lt.s32.totalorder %v957, 2
    %vm959 = vcmp.eq.s32.totalorder %v957, 0
    %v960 = vxor.u32 %v955, 2147483648
    %v961 = vsel %vm959, %v954, %v960
    %vm962 = vcmp.eq.s32.totalorder %v957, 2
    %v963 = vxor.u32 %v954, 2147483648
    %v964 = vsel %vm962, %v963, %v955
    %v965 = vsel %vm958, %v961, %v964
    %v966 = vsel %vm956, nan, %v965
    %v967 = vand.u32 2147483647, %v347
    %vm968 = vcmp.le.f32.partialorder %v967, 0.7853982
    %vm969 = vcmp.lt.s32.totalorder %v347, 0
    %v970 = vand.u32 %v347, 2139095040
    %v971 = vshrl.u32 %v970, 23
    %v972 = vsub.s32 %v971, 127
    %v973 = vand.u32 2147483647, %v347
    %v974 = vand.u32 %v973, 8388607
    %v975 = vor.u32 %v974, 8388608
    %v976 = vsub.s32 0, %v975
    %v977 = vadd.s32 %v972, 1
    %vm978 = vcmp.gt.s32.totalorder %v977, 0
    %v979 = vsel %vm978, %v977, 0
    %v980 = vshrl.u32 %v979, 5
    %v981 = vand.u32 %v979, 31
    %v982 = vsub.s32 32, %v981
    %v983 = vshrl.u32 683565275, %v982
    %v984 = vshll.u32 683565275, %v981
    %v985 = vshrl.u32 2475754826, %v982
    %v986 = vor.u32 %v984, %v985
    %v987 = vshll.u32 2475754826, %v981
    %v988 = vshrl.u32 2131351028, %v982
    %v989 = vor.u32 %v987, %v988
    %v990 = vshll.u32 2131351028, %v981
    %v991 = vshrl.u32 2102212464, %v982
    %v992 = vor.u32 %v990, %v991
    %v993 = vshll.u32 2102212464, %v981
    %v994 = vshrl.u32 920167782, %v982
    %v995 = vor.u32 %v993, %v994
    %v996 = vshll.u32 920167782, %v981
    %v997 = vshrl.u32 1326507024, %v982
    %v998 = vor.u32 %v996, %v997
    %vm999 = vcmp.lt.s32.totalorder %v980, 1
    %vm1000 = vcmp.lt.s32.totalorder %v980, 2
    %vm1001 = vcmp.lt.s32.totalorder %v980, 3
    %vm1002 = vcmp.lt.s32.totalorder %v980, 4
    %v1003 = vsel %vm999, %v983, %v986
    %v1004 = vsel %vm1002, %v992, 2102212464
    %v1005 = vsel %vm1001, %v989, %v1004
    %v1006 = vsel %vm1000, %v1003, %v1005
    %v1007 = vsel %vm999, %v986, %v989
    %v1008 = vsel %vm1002, %v995, 920167782
    %v1009 = vsel %vm1001, %v992, %v1008
    %v1010 = vsel %vm1000, %v1007, %v1009
    %v1011 = vsel %vm999, %v989, %v992
    %v1012 = vsel %vm1002, %v998, 1326507024
    %v1013 = vsel %vm1001, %v995, %v1012
    %v1014 = vsel %vm1000, %v1011, %v1013
    %v1015 = vshll.u32 %v975, 8
    %v1016 = vmul.u32.u64.compose %v1015, %v1014
    %v1017 = vextract.low.u32 %v1016
    %v1018 = vextract.high.u32 %v1016
    %v1019 = vmul.u32.u64.compose %v1015, %v1010
    %v1020 = vextract.low.u32 %v1019
    %v1021 = vextract.high.u32 %v1019
    %v1022 = vmul.u32 %v1015, %v1006
    %v1023 = vadd.s32 %v1018, %v1020
    %vm1024 = vc.u32 %v1018, %v1020
    %v1025 = vadd.s32 %v1021, 1
    %v1026 = vsel %vm1024, %v1025, %v1021
    %v1027 = vadd.s32 %v1022, %v1026
    %v1028 = vadd.s32 %v1027, 536870912
    %v1029 = vshrl.u32 %v1028, 30
    %v1030 = vshll.u32 %v1029, 30
    %v1031 = vsub.s32 %v1027, %v1030
    %vm1032 = vcmp.lt.s32.totalorder %v1031, 0
    %v1033 = vsub.s32 0, %v1031
    %v1034 = vsel %vm1032, %v1033, %v1031
    %v1035 = vclz %v1034
    %v1036 = vsub.s32 %v1035, 2
    %vm1037 = vcmp.gt.s32.totalorder 0, %v1036
    %v1038 = vsel %vm1037, 0, %v1036
    %v1039 = vsub.s32 32, %v1038
    %v1040 = vshll.u32 %v1031, %v1038
    %v1041 = vshrl.u32 %v1023, %v1039
    %v1042 = vor.u32 %v1040, %v1041
    %v1043 = vsub.s32 4294967266, %v1038
    %v1044 = vadd.s32 %v1043, 127
    %v1045 = vshll.u32 %v1044, 23
    %v1046 = vor.u32 4788187, %v1045
    %v1047 = vand.u32 2147483647, %v1046
    %v1049 = vcvt.s32.f32 %v1042
    %v1050 = vmul.f32 %v1049, %v1047
    %v1051 = vxor.u32 %v1050, 2147483648
    %v1052 = vsel %vm969, %v1051, %v1050
    %v1053 = vsub.s32 4, %v1029
    %v1054 = vsel %vm969, %v1053, %v1029
    %v1055 = vsel %vm968, %v347, %v1052
    %v1056 = vsel %vm968, 0, %v1054
    %v1057 = vcosq.f32.pop %v1055
    %v1058 = vsinq.f32.pop %v1055
    %vm1059 = vweird.f32 %v347
    %v1060 = vand.u32 %v1056, 3
    %vm1061 = vcmp.lt.s32.totalorder %v1060, 2
    %vm1062 = vcmp.eq.s32.totalorder %v1060, 0
    %v1063 = vxor.u32 %v1058, 2147483648
    %v1064 = vsel %vm1062, %v1057, %v1063
    %vm1065 = vcmp.eq.s32.totalorder %v1060, 2
    %v1066 = vxor.u32 %v1057, 2147483648
    %v1067 = vsel %vm1065, %v1066, %v1058
    %v1068 = vsel %vm1061, %v1064, %v1067
    %v1069 = vsel %vm1059, nan, %v1068
    %v1070 = vand.u32 2147483647, %v348
    %vm1071 = vcmp.le.f32.partialorder %v1070, 0.7853982
    %vm1072 = vcmp.lt.s32.totalorder %v348, 0
    %v1073 = vand.u32 %v348, 2139095040
    %v1074 = vshrl.u32 %v1073, 23
    %v1075 = vsub.s32 %v1074, 127
    %v1076 = vand.u32 2147483647, %v348
    %v1077 = vand.u32 %v1076, 8388607
    %v1078 = vor.u32 %v1077, 8388608
    %v1079 = vsub.s32 0, %v1078
    %v1080 = vadd.s32 %v1075, 1
    %vm1081 = vcmp.gt.s32.totalorder %v1080, 0
    %v1082 = vsel %vm1081, %v1080, 0
    %v1083 = vshrl.u32 %v1082, 5
    %v1084 = vand.u32 %v1082, 31
    %v1085 = vsub.s32 32, %v1084
    %v1086 = vshrl.u32 683565275, %v1085
    %v1087 = vshll.u32 683565275, %v1084
    %v1088 = vshrl.u32 2475754826, %v1085
    %v1089 = vor.u32 %v1087, %v1088
    %v1090 = vshll.u32 2475754826, %v1084
    %v1091 = vshrl.u32 2131351028, %v1085
    %v1092 = vor.u32 %v1090, %v1091
    %v1093 = vshll.u32 2131351028, %v1084
    %v1094 = vshrl.u32 2102212464, %v1085
    %v1095 = vor.u32 %v1093, %v1094
    %v1096 = vshll.u32 2102212464, %v1084
    %v1097 = vshrl.u32 920167782, %v1085
    %v1098 = vor.u32 %v1096, %v1097
    %v1099 = vshll.u32 920167782, %v1084
    %v1100 = vshrl.u32 1326507024, %v1085
    %v1101 = vor.u32 %v1099, %v1100
    %vm1102 = vcmp.lt.s32.totalorder %v1083, 1
    %vm1103 = vcmp.lt.s32.totalorder %v1083, 2
    %vm1104 = vcmp.lt.s32.totalorder %v1083, 3
    %vm1105 = vcmp.lt.s32.totalorder %v1083, 4
    %v1106 = vsel %vm1102, %v1086, %v1089
    %v1107 = vsel %vm1105, %v1095, 2102212464
    %v1108 = vsel %vm1104, %v1092, %v1107
    %v1109 = vsel %vm1103, %v1106, %v1108
    %v1110 = vsel %vm1102, %v1089, %v1092
    %v1111 = vsel %vm1105, %v1098, 920167782
    %v1112 = vsel %vm1104, %v1095, %v1111
    %v1113 = vsel %vm1103, %v1110, %v1112
    %v1114 = vsel %vm1102, %v1092, %v1095
    %v1115 = vsel %vm1105, %v1101, 1326507024
    %v1116 = vsel %vm1104, %v1098, %v1115
    %v1117 = vsel %vm1103, %v1114, %v1116
    %v1118 = vshll.u32 %v1078, 8
    %v1119 = vmul.u32.u64.compose %v1118, %v1117
    %v1120 = vextract.low.u32 %v1119
    %v1121 = vextract.high.u32 %v1119
    %v1122 = vmul.u32.u64.compose %v1118, %v1113
    %v1123 = vextract.low.u32 %v1122
    %v1124 = vextract.high.u32 %v1122
    %v1125 = vmul.u32 %v1118, %v1109
    %v1126 = vadd.s32 %v1121, %v1123
    %vm1127 = vc.u32 %v1121, %v1123
    %v1128 = vadd.s32 %v1124, 1
    %v1129 = vsel %vm1127, %v1128, %v1124
    %v1130 = vadd.s32 %v1125, %v1129
    %v1131 = vadd.s32 %v1130, 536870912
    %v1132 = vshrl.u32 %v1131, 30
    %v1133 = vshll.u32 %v1132, 30
    %v1134 = vsub.s32 %v1130, %v1133
    %vm1135 = vcmp.lt.s32.totalorder %v1134, 0
    %v1136 = vsub.s32 0, %v1134
    %v1137 = vsel %vm1135, %v1136, %v1134
    %v1138 = vclz %v1137
    %v1139 = vsub.s32 %v1138, 2
    %vm1140 = vcmp.gt.s32.totalorder 0, %v1139
    %v1141 = vsel %vm1140, 0, %v1139
    %v1142 = vsub.s32 32, %v1141
    %v1143 = vshll.u32 %v1134, %v1141
    %v1144 = vshrl.u32 %v1126, %v1142
    %v1145 = vor.u32 %v1143, %v1144
    %v1146 = vsub.s32 4294967266, %v1141
    %v1147 = vadd.s32 %v1146, 127
    %v1148 = vshll.u32 %v1147, 23
    %v1149 = vor.u32 4788187, %v1148
    %v1150 = vand.u32 2147483647, %v1149
    %v1152 = vcvt.s32.f32 %v1145
    %v1153 = vmul.f32 %v1152, %v1150
    %v1154 = vxor.u32 %v1153, 2147483648
    %v1155 = vsel %vm1072, %v1154, %v1153
    %v1156 = vsub.s32 4, %v1132
    %v1157 = vsel %vm1072, %v1156, %v1132
    %v1158 = vsel %vm1071, %v348, %v1155
    %v1159 = vsel %vm1071, 0, %v1157
    %v1160 = vcosq.f32.pop %v1158
    %v1161 = vsinq.f32.pop %v1158
    %vm1162 = vweird.f32 %v348
    %v1163 = vand.u32 %v1159, 3
    %vm1164 = vcmp.lt.s32.totalorder %v1163, 2
    %vm1165 = vcmp.eq.s32.totalorder %v1163, 0
    %v1166 = vxor.u32 %v1161, 2147483648
    %v1167 = vsel %vm1165, %v1160, %v1166
    %vm1168 = vcmp.eq.s32.totalorder %v1163, 2
    %v1169 = vxor.u32 %v1160, 2147483648
    %v1170 = vsel %vm1168, %v1169, %v1161
    %v1171 = vsel %vm1164, %v1167, %v1170
    %v1172 = vsel %vm1162, nan, %v1171
    %v1173 = vmul.f32 %v291, %v451
    %v1174 = vmul.f32 %v298, %v554
    %v1175 = vmul.f32 %v305, %v657
    %v1176 = vmul.f32 %v312, %v760
    %v1177 = vmul.f32 %v319, %v863
    %v1178 = vmul.f32 %v326, %v966
    %v1179 = vmul.f32 %v333, %v1069
    %v1180 = vmul.f32 %v340, %v1172
    %v1181 = vand.u32 2147483647, %v341
    %vm1182 = vcmp.le.f32.partialorder %v1181, 0.7853982
    %vm1183 = vcmp.lt.s32.totalorder %v341, 0
    %v1184 = vand.u32 %v341, 2139095040
    %v1185 = vshrl.u32 %v1184, 23
    %v1186 = vsub.s32 %v1185, 127
    %v1187 = vand.u32 2147483647, %v341
    %v1188 = vand.u32 %v1187, 8388607
    %v1189 = vor.u32 %v1188, 8388608
    %v1190 = vsub.s32 0, %v1189
    %v1191 = vadd.s32 %v1186, 1
    %vm1192 = vcmp.gt.s32.totalorder %v1191, 0
    %v1193 = vsel %vm1192, %v1191, 0
    %v1194 = vshrl.u32 %v1193, 5
    %v1195 = vand.u32 %v1193, 31
    %v1196 = vsub.s32 32, %v1195
    %v1197 = vshrl.u32 683565275, %v1196
    %v1198 = vshll.u32 683565275, %v1195
    %v1199 = vshrl.u32 2475754826, %v1196
    %v1200 = vor.u32 %v1198, %v1199
    %v1201 = vshll.u32 2475754826, %v1195
    %v1202 = vshrl.u32 2131351028, %v1196
    %v1203 = vor.u32 %v1201, %v1202
    %v1204 = vshll.u32 2131351028, %v1195
    %v1205 = vshrl.u32 2102212464, %v1196
    %v1206 = vor.u32 %v1204, %v1205
    %v1207 = vshll.u32 2102212464, %v1195
    %v1208 = vshrl.u32 920167782, %v1196
    %v1209 = vor.u32 %v1207, %v1208
    %v1210 = vshll.u32 920167782, %v1195
    %v1211 = vshrl.u32 1326507024, %v1196
    %v1212 = vor.u32 %v1210, %v1211
    %vm1213 = vcmp.lt.s32.totalorder %v1194, 1
    %vm1214 = vcmp.lt.s32.totalorder %v1194, 2
    %vm1215 = vcmp.lt.s32.totalorder %v1194, 3
    %vm1216 = vcmp.lt.s32.totalorder %v1194, 4
    %v1217 = vsel %vm1213, %v1197, %v1200
    %v1218 = vsel %vm1216, %v1206, 2102212464
    %v1219 = vsel %vm1215, %v1203, %v1218
    %v1220 = vsel %vm1214, %v1217, %v1219
    %v1221 = vsel %vm1213, %v1200, %v1203
    %v1222 = vsel %vm1216, %v1209, 920167782
    %v1223 = vsel %vm1215, %v1206, %v1222
    %v1224 = vsel %vm1214, %v1221, %v1223
    %v1225 = vsel %vm1213, %v1203, %v1206
    %v1226 = vsel %vm1216, %v1212, 1326507024
    %v1227 = vsel %vm1215, %v1209, %v1226
    %v1228 = vsel %vm1214, %v1225, %v1227
    %v1229 = vshll.u32 %v1189, 8
    %v1230 = vmul.u32.u64.compose %v1229, %v1228
    %v1231 = vextract.low.u32 %v1230
    %v1232 = vextract.high.u32 %v1230
    %v1233 = vmul.u32.u64.compose %v1229, %v1224
    %v1234 = vextract.low.u32 %v1233
    %v1235 = vextract.high.u32 %v1233
    %v1236 = vmul.u32 %v1229, %v1220
    %v1237 = vadd.s32 %v1232, %v1234
    %vm1238 = vc.u32 %v1232, %v1234
    %v1239 = vadd.s32 %v1235, 1
    %v1240 = vsel %vm1238, %v1239, %v1235
    %v1241 = vadd.s32 %v1236, %v1240
    %v1242 = vadd.s32 %v1241, 536870912
    %v1243 = vshrl.u32 %v1242, 30
    %v1244 = vshll.u32 %v1243, 30
    %v1245 = vsub.s32 %v1241, %v1244
    %vm1246 = vcmp.lt.s32.totalorder %v1245, 0
    %v1247 = vsub.s32 0, %v1245
    %v1248 = vsel %vm1246, %v1247, %v1245
    %v1249 = vclz %v1248
    %v1250 = vsub.s32 %v1249, 2
    %vm1251 = vcmp.gt.s32.totalorder 0, %v1250
    %v1252 = vsel %vm1251, 0, %v1250
    %v1253 = vsub.s32 32, %v1252
    %v1254 = vshll.u32 %v1245, %v1252
    %v1255 = vshrl.u32 %v1237, %v1253
    %v1256 = vor.u32 %v1254, %v1255
    %v1257 = vsub.s32 4294967266, %v1252
    %v1258 = vadd.s32 %v1257, 127
    %v1259 = vshll.u32 %v1258, 23
    %v1260 = vor.u32 4788187, %v1259
    %v1261 = vand.u32 2147483647, %v1260
    %v1263 = vcvt.s32.f32 %v1256
    %v1264 = vmul.f32 %v1263, %v1261
    %v1265 = vxor.u32 %v1264, 2147483648
    %v1266 = vsel %vm1183, %v1265, %v1264
    %v1267 = vsub.s32 4, %v1243
    %v1268 = vsel %vm1183, %v1267, %v1243
    %v1269 = vsel %vm1182, %v341, %v1266
    %v1270 = vsel %vm1182, 0, %v1268
    %v1271 = vcosq.f32.pop %v1269
    %v1272 = vsinq.f32.pop %v1269
    %vm1273 = vweird.f32 %v341
    %v1274 = vadd.s32 %v1270, 3
    %v1275 = vand.u32 %v1274, 3
    %vm1276 = vcmp.lt.s32.totalorder %v1275, 2
    %vm1277 = vcmp.eq.s32.totalorder %v1275, 0
    %v1278 = vxor.u32 %v1272, 2147483648
    %v1279 = vsel %vm1277, %v1271, %v1278
    %vm1280 = vcmp.eq.s32.totalorder %v1275, 2
    %v1281 = vxor.u32 %v1271, 2147483648
    %v1282 = vsel %vm1280, %v1281, %v1272
    %v1283 = vsel %vm1276, %v1279, %v1282
    %v1284 = vsel %vm1273, nan, %v1283
    %v1285 = vand.u32 2147483647, %v342
    %vm1286 = vcmp.le.f32.partialorder %v1285, 0.7853982
    %vm1287 = vcmp.lt.s32.totalorder %v342, 0
    %v1288 = vand.u32 %v342, 2139095040
    %v1289 = vshrl.u32 %v1288, 23
    %v1290 = vsub.s32 %v1289, 127
    %v1291 = vand.u32 2147483647, %v342
    %v1292 = vand.u32 %v1291, 8388607
    %v1293 = vor.u32 %v1292, 8388608
    %v1294 = vsub.s32 0, %v1293
    %v1295 = vadd.s32 %v1290, 1
    %vm1296 = vcmp.gt.s32.totalorder %v1295, 0
    %v1297 = vsel %vm1296, %v1295, 0
    %v1298 = vshrl.u32 %v1297, 5
    %v1299 = vand.u32 %v1297, 31
    %v1300 = vsub.s32 32, %v1299
    %v1301 = vshrl.u32 683565275, %v1300
    %v1302 = vshll.u32 683565275, %v1299
    %v1303 = vshrl.u32 2475754826, %v1300
    %v1304 = vor.u32 %v1302, %v1303
    %v1305 = vshll.u32 2475754826, %v1299
    %v1306 = vshrl.u32 2131351028, %v1300
    %v1307 = vor.u32 %v1305, %v1306
    %v1308 = vshll.u32 2131351028, %v1299
    %v1309 = vshrl.u32 2102212464, %v1300
    %v1310 = vor.u32 %v1308, %v1309
    %v1311 = vshll.u32 2102212464, %v1299
    %v1312 = vshrl.u32 920167782, %v1300
    %v1313 = vor.u32 %v1311, %v1312
    %v1314 = vshll.u32 920167782, %v1299
    %v1315 = vshrl.u32 1326507024, %v1300
    %v1316 = vor.u32 %v1314, %v1315
    %vm1317 = vcmp.lt.s32.totalorder %v1298, 1
    %vm1318 = vcmp.lt.s32.totalorder %v1298, 2
    %vm1319 = vcmp.lt.s32.totalorder %v1298, 3
    %vm1320 = vcmp.lt.s32.totalorder %v1298, 4
    %v1321 = vsel %vm1317, %v1301, %v1304
    %v1322 = vsel %vm1320, %v1310, 2102212464
    %v1323 = vsel %vm1319, %v1307, %v1322
    %v1324 = vsel %vm1318, %v1321, %v1323
    %v1325 = vsel %vm1317, %v1304, %v1307
    %v1326 = vsel %vm1320, %v1313, 920167782
    %v1327 = vsel %vm1319, %v1310, %v1326
    %v1328 = vsel %vm1318, %v1325, %v1327
    %v1329 = vsel %vm1317, %v1307, %v1310
    %v1330 = vsel %vm1320, %v1316, 1326507024
    %v1331 = vsel %vm1319, %v1313, %v1330
    %v1332 = vsel %vm1318, %v1329, %v1331
    %v1333 = vshll.u32 %v1293, 8
    %v1334 = vmul.u32.u64.compose %v1333, %v1332
    %v1335 = vextract.low.u32 %v1334
    %v1336 = vextract.high.u32 %v1334
    %v1337 = vmul.u32.u64.compose %v1333, %v1328
    %v1338 = vextract.low.u32 %v1337
    %v1339 = vextract.high.u32 %v1337
    %v1340 = vmul.u32 %v1333, %v1324
    %v1341 = vadd.s32 %v1336, %v1338
    %vm1342 = vc.u32 %v1336, %v1338
    %v1343 = vadd.s32 %v1339, 1
    %v1344 = vsel %vm1342, %v1343, %v1339
    %v1345 = vadd.s32 %v1340, %v1344
    %v1346 = vadd.s32 %v1345, 536870912
    %v1347 = vshrl.u32 %v1346, 30
    %v1348 = vshll.u32 %v1347, 30
    %v1349 = vsub.s32 %v1345, %v1348
    %vm1350 = vcmp.lt.s32.totalorder %v1349, 0
    %v1351 = vsub.s32 0, %v1349
    %v1352 = vsel %vm1350, %v1351, %v1349
    %v1353 = vclz %v1352
    %v1354 = vsub.s32 %v1353, 2
    %vm1355 = vcmp.gt.s32.totalorder 0, %v1354
    %v1356 = vsel %vm1355, 0, %v1354
    %v1357 = vsub.s32 32, %v1356
    %v1358 = vshll.u32 %v1349, %v1356
    %v1359 = vshrl.u32 %v1341, %v1357
    %v1360 = vor.u32 %v1358, %v1359
    %v1361 = vsub.s32 4294967266, %v1356
    %v1362 = vadd.s32 %v1361, 127
    %v1363 = vshll.u32 %v1362, 23
    %v1364 = vor.u32 4788187, %v1363
    %v1365 = vand.u32 2147483647, %v1364
    %v1367 = vcvt.s32.f32 %v1360
    %v1368 = vmul.f32 %v1367, %v1365
    %v1369 = vxor.u32 %v1368, 2147483648
    %v1370 = vsel %vm1287, %v1369, %v1368
    %v1371 = vsub.s32 4, %v1347
    %v1372 = vsel %vm1287, %v1371, %v1347
    %v1373 = vsel %vm1286, %v342, %v1370
    %v1374 = vsel %vm1286, 0, %v1372
    %v1375 = vcosq.f32.pop %v1373
    %v1376 = vsinq.f32.pop %v1373
    %vm1377 = vweird.f32 %v342
    %v1378 = vadd.s32 %v1374, 3
    %v1379 = vand.u32 %v1378, 3
    %vm1380 = vcmp.lt.s32.totalorder %v1379, 2
    %vm1381 = vcmp.eq.s32.totalorder %v1379, 0
    %v1382 = vxor.u32 %v1376, 2147483648
    %v1383 = vsel %vm1381, %v1375, %v1382
    %vm1384 = vcmp.eq.s32.totalorder %v1379, 2
    %v1385 = vxor.u32 %v1375, 2147483648
    %v1386 = vsel %vm1384, %v1385, %v1376
    %v1387 = vsel %vm1380, %v1383, %v1386
    %v1388 = vsel %vm1377, nan, %v1387
    %v1389 = vand.u32 2147483647, %v343
    %vm1390 = vcmp.le.f32.partialorder %v1389, 0.7853982
    %vm1391 = vcmp.lt.s32.totalorder %v343, 0
    %v1392 = vand.u32 %v343, 2139095040
    %v1393 = vshrl.u32 %v1392, 23
    %v1394 = vsub.s32 %v1393, 127
    %v1395 = vand.u32 2147483647, %v343
    %v1396 = vand.u32 %v1395, 8388607
    %v1397 = vor.u32 %v1396, 8388608
    %v1398 = vsub.s32 0, %v1397
    %v1399 = vadd.s32 %v1394, 1
    %vm1400 = vcmp.gt.s32.totalorder %v1399, 0
    %v1401 = vsel %vm1400, %v1399, 0
    %v1402 = vshrl.u32 %v1401, 5
    %v1403 = vand.u32 %v1401, 31
    %v1404 = vsub.s32 32, %v1403
    %v1405 = vshrl.u32 683565275, %v1404
    %v1406 = vshll.u32 683565275, %v1403
    %v1407 = vshrl.u32 2475754826, %v1404
    %v1408 = vor.u32 %v1406, %v1407
    %v1409 = vshll.u32 2475754826, %v1403
    %v1410 = vshrl.u32 2131351028, %v1404
    %v1411 = vor.u32 %v1409, %v1410
    %v1412 = vshll.u32 2131351028, %v1403
    %v1413 = vshrl.u32 2102212464, %v1404
    %v1414 = vor.u32 %v1412, %v1413
    %v1415 = vshll.u32 2102212464, %v1403
    %v1416 = vshrl.u32 920167782, %v1404
    %v1417 = vor.u32 %v1415, %v1416
    %v1418 = vshll.u32 920167782, %v1403
    %v1419 = vshrl.u32 1326507024, %v1404
    %v1420 = vor.u32 %v1418, %v1419
    %vm1421 = vcmp.lt.s32.totalorder %v1402, 1
    %vm1422 = vcmp.lt.s32.totalorder %v1402, 2
    %vm1423 = vcmp.lt.s32.totalorder %v1402, 3
    %vm1424 = vcmp.lt.s32.totalorder %v1402, 4
    %v1425 = vsel %vm1421, %v1405, %v1408
    %v1426 = vsel %vm1424, %v1414, 2102212464
    %v1427 = vsel %vm1423, %v1411, %v1426
    %v1428 = vsel %vm1422, %v1425, %v1427
    %v1429 = vsel %vm1421, %v1408, %v1411
    %v1430 = vsel %vm1424, %v1417, 920167782
    %v1431 = vsel %vm1423, %v1414, %v1430
    %v1432 = vsel %vm1422, %v1429, %v1431
    %v1433 = vsel %vm1421, %v1411, %v1414
    %v1434 = vsel %vm1424, %v1420, 1326507024
    %v1435 = vsel %vm1423, %v1417, %v1434
    %v1436 = vsel %vm1422, %v1433, %v1435
    %v1437 = vshll.u32 %v1397, 8
    %v1438 = vmul.u32.u64.compose %v1437, %v1436
    %v1439 = vextract.low.u32 %v1438
    %v1440 = vextract.high.u32 %v1438
    %v1441 = vmul.u32.u64.compose %v1437, %v1432
    %v1442 = vextract.low.u32 %v1441
    %v1443 = vextract.high.u32 %v1441
    %v1444 = vmul.u32 %v1437, %v1428
    %v1445 = vadd.s32 %v1440, %v1442
    %vm1446 = vc.u32 %v1440, %v1442
    %v1447 = vadd.s32 %v1443, 1
    %v1448 = vsel %vm1446, %v1447, %v1443
    %v1449 = vadd.s32 %v1444, %v1448
    %v1450 = vadd.s32 %v1449, 536870912
    %v1451 = vshrl.u32 %v1450, 30
    %v1452 = vshll.u32 %v1451, 30
    %v1453 = vsub.s32 %v1449, %v1452
    %vm1454 = vcmp.lt.s32.totalorder %v1453, 0
    %v1455 = vsub.s32 0, %v1453
    %v1456 = vsel %vm1454, %v1455, %v1453
    %v1457 = vclz %v1456
    %v1458 = vsub.s32 %v1457, 2
    %vm1459 = vcmp.gt.s32.totalorder 0, %v1458
    %v1460 = vsel %vm1459, 0, %v1458
    %v1461 = vsub.s32 32, %v1460
    %v1462 = vshll.u32 %v1453, %v1460
    %v1463 = vshrl.u32 %v1445, %v1461
    %v1464 = vor.u32 %v1462, %v1463
    %v1465 = vsub.s32 4294967266, %v1460
    %v1466 = vadd.s32 %v1465, 127
    %v1467 = vshll.u32 %v1466, 23
    %v1468 = vor.u32 4788187, %v1467
    %v1469 = vand.u32 2147483647, %v1468
    %v1471 = vcvt.s32.f32 %v1464
    %v1472 = vmul.f32 %v1471, %v1469
    %v1473 = vxor.u32 %v1472, 2147483648
    %v1474 = vsel %vm1391, %v1473, %v1472
    %v1475 = vsub.s32 4, %v1451
    %v1476 = vsel %vm1391, %v1475, %v1451
    %v1477 = vsel %vm1390, %v343, %v1474
    %v1478 = vsel %vm1390, 0, %v1476
    %v1479 = vcosq.f32.pop %v1477
    %v1480 = vsinq.f32.pop %v1477
    %vm1481 = vweird.f32 %v343
    %v1482 = vadd.s32 %v1478, 3
    %v1483 = vand.u32 %v1482, 3
    %vm1484 = vcmp.lt.s32.totalorder %v1483, 2
    %vm1485 = vcmp.eq.s32.totalorder %v1483, 0
    %v1486 = vxor.u32 %v1480, 2147483648
    %v1487 = vsel %vm1485, %v1479, %v1486
    %vm1488 = vcmp.eq.s32.totalorder %v1483, 2
    %v1489 = vxor.u32 %v1479, 2147483648
    %v1490 = vsel %vm1488, %v1489, %v1480
    %v1491 = vsel %vm1484, %v1487, %v1490
    %v1492 = vsel %vm1481, nan, %v1491
    %v1493 = vand.u32 2147483647, %v344
    %vm1494 = vcmp.le.f32.partialorder %v1493, 0.7853982
    %vm1495 = vcmp.lt.s32.totalorder %v344, 0
    %v1496 = vand.u32 %v344, 2139095040
    %v1497 = vshrl.u32 %v1496, 23
    %v1498 = vsub.s32 %v1497, 127
    %v1499 = vand.u32 2147483647, %v344
    %v1500 = vand.u32 %v1499, 8388607
    %v1501 = vor.u32 %v1500, 8388608
    %v1502 = vsub.s32 0, %v1501
    %v1503 = vadd.s32 %v1498, 1
    %vm1504 = vcmp.gt.s32.totalorder %v1503, 0
    %v1505 = vsel %vm1504, %v1503, 0
    %v1506 = vshrl.u32 %v1505, 5
    %v1507 = vand.u32 %v1505, 31
    %v1508 = vsub.s32 32, %v1507
    %v1509 = vshrl.u32 683565275, %v1508
    %v1510 = vshll.u32 683565275, %v1507
    %v1511 = vshrl.u32 2475754826, %v1508
    %v1512 = vor.u32 %v1510, %v1511
    %v1513 = vshll.u32 2475754826, %v1507
    %v1514 = vshrl.u32 2131351028, %v1508
    %v1515 = vor.u32 %v1513, %v1514
    %v1516 = vshll.u32 2131351028, %v1507
    %v1517 = vshrl.u32 2102212464, %v1508
    %v1518 = vor.u32 %v1516, %v1517
    %v1519 = vshll.u32 2102212464, %v1507
    %v1520 = vshrl.u32 920167782, %v1508
    %v1521 = vor.u32 %v1519, %v1520
    %v1522 = vshll.u32 920167782, %v1507
    %v1523 = vshrl.u32 1326507024, %v1508
    %v1524 = vor.u32 %v1522, %v1523
    %vm1525 = vcmp.lt.s32.totalorder %v1506, 1
    %vm1526 = vcmp.lt.s32.totalorder %v1506, 2
    %vm1527 = vcmp.lt.s32.totalorder %v1506, 3
    %vm1528 = vcmp.lt.s32.totalorder %v1506, 4
    %v1529 = vsel %vm1525, %v1509, %v1512
    %v1530 = vsel %vm1528, %v1518, 2102212464
    %v1531 = vsel %vm1527, %v1515, %v1530
    %v1532 = vsel %vm1526, %v1529, %v1531
    %v1533 = vsel %vm1525, %v1512, %v1515
    %v1534 = vsel %vm1528, %v1521, 920167782
    %v1535 = vsel %vm1527, %v1518, %v1534
    %v1536 = vsel %vm1526, %v1533, %v1535
    %v1537 = vsel %vm1525, %v1515, %v1518
    %v1538 = vsel %vm1528, %v1524, 1326507024
    %v1539 = vsel %vm1527, %v1521, %v1538
    %v1540 = vsel %vm1526, %v1537, %v1539
    %v1541 = vshll.u32 %v1501, 8
    %v1542 = vmul.u32.u64.compose %v1541, %v1540
    %v1543 = vextract.low.u32 %v1542
    %v1544 = vextract.high.u32 %v1542
    %v1545 = vmul.u32.u64.compose %v1541, %v1536
    %v1546 = vextract.low.u32 %v1545
    %v1547 = vextract.high.u32 %v1545
    %v1548 = vmul.u32 %v1541, %v1532
    %v1549 = vadd.s32 %v1544, %v1546
    %vm1550 = vc.u32 %v1544, %v1546
    %v1551 = vadd.s32 %v1547, 1
    %v1552 = vsel %vm1550, %v1551, %v1547
    %v1553 = vadd.s32 %v1548, %v1552
    %v1554 = vadd.s32 %v1553, 536870912
    %v1555 = vshrl.u32 %v1554, 30
    %v1556 = vshll.u32 %v1555, 30
    %v1557 = vsub.s32 %v1553, %v1556
    %vm1558 = vcmp.lt.s32.totalorder %v1557, 0
    %v1559 = vsub.s32 0, %v1557
    %v1560 = vsel %vm1558, %v1559, %v1557
    %v1561 = vclz %v1560
    %v1562 = vsub.s32 %v1561, 2
    %vm1563 = vcmp.gt.s32.totalorder 0, %v1562
    %v1564 = vsel %vm1563, 0, %v1562
    %v1565 = vsub.s32 32, %v1564
    %v1566 = vshll.u32 %v1557, %v1564
    %v1567 = vshrl.u32 %v1549, %v1565
    %v1568 = vor.u32 %v1566, %v1567
    %v1569 = vsub.s32 4294967266, %v1564
    %v1570 = vadd.s32 %v1569, 127
    %v1571 = vshll.u32 %v1570, 23
    %v1572 = vor.u32 4788187, %v1571
    %v1573 = vand.u32 2147483647, %v1572
    %v1575 = vcvt.s32.f32 %v1568
    %v1576 = vmul.f32 %v1575, %v1573
    %v1577 = vxor.u32 %v1576, 2147483648
    %v1578 = vsel %vm1495, %v1577, %v1576
    %v1579 = vsub.s32 4, %v1555
    %v1580 = vsel %vm1495, %v1579, %v1555
    %v1581 = vsel %vm1494, %v344, %v1578
    %v1582 = vsel %vm1494, 0, %v1580
    %v1583 = vcosq.f32.pop %v1581
    %v1584 = vsinq.f32.pop %v1581
    %vm1585 = vweird.f32 %v344
    %v1586 = vadd.s32 %v1582, 3
    %v1587 = vand.u32 %v1586, 3
    %vm1588 = vcmp.lt.s32.totalorder %v1587, 2
    %vm1589 = vcmp.eq.s32.totalorder %v1587, 0
    %v1590 = vxor.u32 %v1584, 2147483648
    %v1591 = vsel %vm1589, %v1583, %v1590
    %vm1592 = vcmp.eq.s32.totalorder %v1587, 2
    %v1593 = vxor.u32 %v1583, 2147483648
    %v1594 = vsel %vm1592, %v1593, %v1584
    %v1595 = vsel %vm1588, %v1591, %v1594
    %v1596 = vsel %vm1585, nan, %v1595
    %v1597 = vand.u32 2147483647, %v345
    %vm1598 = vcmp.le.f32.partialorder %v1597, 0.7853982
    %vm1599 = vcmp.lt.s32.totalorder %v345, 0
    %v1600 = vand.u32 %v345, 2139095040
    %v1601 = vshrl.u32 %v1600, 23
    %v1602 = vsub.s32 %v1601, 127
    %v1603 = vand.u32 2147483647, %v345
    %v1604 = vand.u32 %v1603, 8388607
    %v1605 = vor.u32 %v1604, 8388608
    %v1606 = vsub.s32 0, %v1605
    %v1607 = vadd.s32 %v1602, 1
    %vm1608 = vcmp.gt.s32.totalorder %v1607, 0
    %v1609 = vsel %vm1608, %v1607, 0
    %v1610 = vshrl.u32 %v1609, 5
    %v1611 = vand.u32 %v1609, 31
    %v1612 = vsub.s32 32, %v1611
    %v1613 = vshrl.u32 683565275, %v1612
    %v1614 = vshll.u32 683565275, %v1611
    %v1615 = vshrl.u32 2475754826, %v1612
    %v1616 = vor.u32 %v1614, %v1615
    %v1617 = vshll.u32 2475754826, %v1611
    %v1618 = vshrl.u32 2131351028, %v1612
    %v1619 = vor.u32 %v1617, %v1618
    %v1620 = vshll.u32 2131351028, %v1611
    %v1621 = vshrl.u32 2102212464, %v1612
    %v1622 = vor.u32 %v1620, %v1621
    %v1623 = vshll.u32 2102212464, %v1611
    %v1624 = vshrl.u32 920167782, %v1612
    %v1625 = vor.u32 %v1623, %v1624
    %v1626 = vshll.u32 920167782, %v1611
    %v1627 = vshrl.u32 1326507024, %v1612
    %v1628 = vor.u32 %v1626, %v1627
    %vm1629 = vcmp.lt.s32.totalorder %v1610, 1
    %vm1630 = vcmp.lt.s32.totalorder %v1610, 2
    %vm1631 = vcmp.lt.s32.totalorder %v1610, 3
    %vm1632 = vcmp.lt.s32.totalorder %v1610, 4
    %v1633 = vsel %vm1629, %v1613, %v1616
    %v1634 = vsel %vm1632, %v1622, 2102212464
    %v1635 = vsel %vm1631, %v1619, %v1634
    %v1636 = vsel %vm1630, %v1633, %v1635
    %v1637 = vsel %vm1629, %v1616, %v1619
    %v1638 = vsel %vm1632, %v1625, 920167782
    %v1639 = vsel %vm1631, %v1622, %v1638
    %v1640 = vsel %vm1630, %v1637, %v1639
    %v1641 = vsel %vm1629, %v1619, %v1622
    %v1642 = vsel %vm1632, %v1628, 1326507024
    %v1643 = vsel %vm1631, %v1625, %v1642
    %v1644 = vsel %vm1630, %v1641, %v1643
    %v1645 = vshll.u32 %v1605, 8
    %v1646 = vmul.u32.u64.compose %v1645, %v1644
    %v1647 = vextract.low.u32 %v1646
    %v1648 = vextract.high.u32 %v1646
    %v1649 = vmul.u32.u64.compose %v1645, %v1640
    %v1650 = vextract.low.u32 %v1649
    %v1651 = vextract.high.u32 %v1649
    %v1652 = vmul.u32 %v1645, %v1636
    %v1653 = vadd.s32 %v1648, %v1650
    %vm1654 = vc.u32 %v1648, %v1650
    %v1655 = vadd.s32 %v1651, 1
    %v1656 = vsel %vm1654, %v1655, %v1651
    %v1657 = vadd.s32 %v1652, %v1656
    %v1658 = vadd.s32 %v1657, 536870912
    %v1659 = vshrl.u32 %v1658, 30
    %v1660 = vshll.u32 %v1659, 30
    %v1661 = vsub.s32 %v1657, %v1660
    %vm1662 = vcmp.lt.s32.totalorder %v1661, 0
    %v1663 = vsub.s32 0, %v1661
    %v1664 = vsel %vm1662, %v1663, %v1661
    %v1665 = vclz %v1664
    %v1666 = vsub.s32 %v1665, 2
    %vm1667 = vcmp.gt.s32.totalorder 0, %v1666
    %v1668 = vsel %vm1667, 0, %v1666
    %v1669 = vsub.s32 32, %v1668
    %v1670 = vshll.u32 %v1661, %v1668
    %v1671 = vshrl.u32 %v1653, %v1669
    %v1672 = vor.u32 %v1670, %v1671
    %v1673 = vsub.s32 4294967266, %v1668
    %v1674 = vadd.s32 %v1673, 127
    %v1675 = vshll.u32 %v1674, 23
    %v1676 = vor.u32 4788187, %v1675
    %v1677 = vand.u32 2147483647, %v1676
    %v1679 = vcvt.s32.f32 %v1672
    %v1680 = vmul.f32 %v1679, %v1677
    %v1681 = vxor.u32 %v1680, 2147483648
    %v1682 = vsel %vm1599, %v1681, %v1680
    %v1683 = vsub.s32 4, %v1659
    %v1684 = vsel %vm1599, %v1683, %v1659
    %v1685 = vsel %vm1598, %v345, %v1682
    %v1686 = vsel %vm1598, 0, %v1684
    %v1687 = vcosq.f32.pop %v1685
    %v1688 = vsinq.f32.pop %v1685
    %vm1689 = vweird.f32 %v345
    %v1690 = vadd.s32 %v1686, 3
    %v1691 = vand.u32 %v1690, 3
    %vm1692 = vcmp.lt.s32.totalorder %v1691, 2
    %vm1693 = vcmp.eq.s32.totalorder %v1691, 0
    %v1694 = vxor.u32 %v1688, 2147483648
    %v1695 = vsel %vm1693, %v1687, %v1694
    %vm1696 = vcmp.eq.s32.totalorder %v1691, 2
    %v1697 = vxor.u32 %v1687, 2147483648
    %v1698 = vsel %vm1696, %v1697, %v1688
    %v1699 = vsel %vm1692, %v1695, %v1698
    %v1700 = vsel %vm1689, nan, %v1699
    %v1701 = vand.u32 2147483647, %v346
    %vm1702 = vcmp.le.f32.partialorder %v1701, 0.7853982
    %vm1703 = vcmp.lt.s32.totalorder %v346, 0
    %v1704 = vand.u32 %v346, 2139095040
    %v1705 = vshrl.u32 %v1704, 23
    %v1706 = vsub.s32 %v1705, 127
    %v1707 = vand.u32 2147483647, %v346
    %v1708 = vand.u32 %v1707, 8388607
    %v1709 = vor.u32 %v1708, 8388608
    %v1710 = vsub.s32 0, %v1709
    %v1711 = vadd.s32 %v1706, 1
    %vm1712 = vcmp.gt.s32.totalorder %v1711, 0
    %v1713 = vsel %vm1712, %v1711, 0
    %v1714 = vshrl.u32 %v1713, 5
    %v1715 = vand.u32 %v1713, 31
    %v1716 = vsub.s32 32, %v1715
    %v1717 = vshrl.u32 683565275, %v1716
    %v1718 = vshll.u32 683565275, %v1715
    %v1719 = vshrl.u32 2475754826, %v1716
    %v1720 = vor.u32 %v1718, %v1719
    %v1721 = vshll.u32 2475754826, %v1715
    %v1722 = vshrl.u32 2131351028, %v1716
    %v1723 = vor.u32 %v1721, %v1722
    %v1724 = vshll.u32 2131351028, %v1715
    %v1725 = vshrl.u32 2102212464, %v1716
    %v1726 = vor.u32 %v1724, %v1725
    %v1727 = vshll.u32 2102212464, %v1715
    %v1728 = vshrl.u32 920167782, %v1716
    %v1729 = vor.u32 %v1727, %v1728
    %v1730 = vshll.u32 920167782, %v1715
    %v1731 = vshrl.u32 1326507024, %v1716
    %v1732 = vor.u32 %v1730, %v1731
    %vm1733 = vcmp.lt.s32.totalorder %v1714, 1
    %vm1734 = vcmp.lt.s32.totalorder %v1714, 2
    %vm1735 = vcmp.lt.s32.totalorder %v1714, 3
    %vm1736 = vcmp.lt.s32.totalorder %v1714, 4
    %v1737 = vsel %vm1733, %v1717, %v1720
    %v1738 = vsel %vm1736, %v1726, 2102212464
    %v1739 = vsel %vm1735, %v1723, %v1738
    %v1740 = vsel %vm1734, %v1737, %v1739
    %v1741 = vsel %vm1733, %v1720, %v1723
    %v1742 = vsel %vm1736, %v1729, 920167782
    %v1743 = vsel %vm1735, %v1726, %v1742
    %v1744 = vsel %vm1734, %v1741, %v1743
    %v1745 = vsel %vm1733, %v1723, %v1726
    %v1746 = vsel %vm1736, %v1732, 1326507024
    %v1747 = vsel %vm1735, %v1729, %v1746
    %v1748 = vsel %vm1734, %v1745, %v1747
    %v1749 = vshll.u32 %v1709, 8
    %v1750 = vmul.u32.u64.compose %v1749, %v1748
    %v1751 = vextract.low.u32 %v1750
    %v1752 = vextract.high.u32 %v1750
    %v1753 = vmul.u32.u64.compose %v1749, %v1744
    %v1754 = vextract.low.u32 %v1753
    %v1755 = vextract.high.u32 %v1753
    %v1756 = vmul.u32 %v1749, %v1740
    %v1757 = vadd.s32 %v1752, %v1754
    %vm1758 = vc.u32 %v1752, %v1754
    %v1759 = vadd.s32 %v1755, 1
    %v1760 = vsel %vm1758, %v1759, %v1755
    %v1761 = vadd.s32 %v1756, %v1760
    %v1762 = vadd.s32 %v1761, 536870912
    %v1763 = vshrl.u32 %v1762, 30
    %v1764 = vshll.u32 %v1763, 30
    %v1765 = vsub.s32 %v1761, %v1764
    %vm1766 = vcmp.lt.s32.totalorder %v1765, 0
    %v1767 = vsub.s32 0, %v1765
    %v1768 = vsel %vm1766, %v1767, %v1765
    %v1769 = vclz %v1768
    %v1770 = vsub.s32 %v1769, 2
    %vm1771 = vcmp.gt.s32.totalorder 0, %v1770
    %v1772 = vsel %vm1771, 0, %v1770
    %v1773 = vsub.s32 32, %v1772
    %v1774 = vshll.u32 %v1765, %v1772
    %v1775 = vshrl.u32 %v1757, %v1773
    %v1776 = vor.u32 %v1774, %v1775
    %v1777 = vsub.s32 4294967266, %v1772
    %v1778 = vadd.s32 %v1777, 127
    %v1779 = vshll.u32 %v1778, 23
    %v1780 = vor.u32 4788187, %v1779
    %v1781 = vand.u32 2147483647, %v1780
    %v1783 = vcvt.s32.f32 %v1776
    %v1784 = vmul.f32 %v1783, %v1781
    %v1785 = vxor.u32 %v1784, 2147483648
    %v1786 = vsel %vm1703, %v1785, %v1784
    %v1787 = vsub.s32 4, %v1763
    %v1788 = vsel %vm1703, %v1787, %v1763
    %v1789 = vsel %vm1702, %v346, %v1786
    %v1790 = vsel %vm1702, 0, %v1788
    %v1791 = vcosq.f32.pop %v1789
    %v1792 = vsinq.f32.pop %v1789
    %vm1793 = vweird.f32 %v346
    %v1794 = vadd.s32 %v1790, 3
    %v1795 = vand.u32 %v1794, 3
    %vm1796 = vcmp.lt.s32.totalorder %v1795, 2
    %vm1797 = vcmp.eq.s32.totalorder %v1795, 0
    %v1798 = vxor.u32 %v1792, 2147483648
    %v1799 = vsel %vm1797, %v1791, %v1798
    %vm1800 = vcmp.eq.s32.totalorder %v1795, 2
    %v1801 = vxor.u32 %v1791, 2147483648
    %v1802 = vsel %vm1800, %v1801, %v1792
    %v1803 = vsel %vm1796, %v1799, %v1802
    %v1804 = vsel %vm1793, nan, %v1803
    %v1805 = vand.u32 2147483647, %v347
    %vm1806 = vcmp.le.f32.partialorder %v1805, 0.7853982
    %vm1807 = vcmp.lt.s32.totalorder %v347, 0
    %v1808 = vand.u32 %v347, 2139095040
    %v1809 = vshrl.u32 %v1808, 23
    %v1810 = vsub.s32 %v1809, 127
    %v1811 = vand.u32 2147483647, %v347
    %v1812 = vand.u32 %v1811, 8388607
    %v1813 = vor.u32 %v1812, 8388608
    %v1814 = vsub.s32 0, %v1813
    %v1815 = vadd.s32 %v1810, 1
    %vm1816 = vcmp.gt.s32.totalorder %v1815, 0
    %v1817 = vsel %vm1816, %v1815, 0
    %v1818 = vshrl.u32 %v1817, 5
    %v1819 = vand.u32 %v1817, 31
    %v1820 = vsub.s32 32, %v1819
    %v1821 = vshrl.u32 683565275, %v1820
    %v1822 = vshll.u32 683565275, %v1819
    %v1823 = vshrl.u32 2475754826, %v1820
    %v1824 = vor.u32 %v1822, %v1823
    %v1825 = vshll.u32 2475754826, %v1819
    %v1826 = vshrl.u32 2131351028, %v1820
    %v1827 = vor.u32 %v1825, %v1826
    %v1828 = vshll.u32 2131351028, %v1819
    %v1829 = vshrl.u32 2102212464, %v1820
    %v1830 = vor.u32 %v1828, %v1829
    %v1831 = vshll.u32 2102212464, %v1819
    %v1832 = vshrl.u32 920167782, %v1820
    %v1833 = vor.u32 %v1831, %v1832
    %v1834 = vshll.u32 920167782, %v1819
    %v1835 = vshrl.u32 1326507024, %v1820
    %v1836 = vor.u32 %v1834, %v1835
    %vm1837 = vcmp.lt.s32.totalorder %v1818, 1
    %vm1838 = vcmp.lt.s32.totalorder %v1818, 2
    %vm1839 = vcmp.lt.s32.totalorder %v1818, 3
    %vm1840 = vcmp.lt.s32.totalorder %v1818, 4
    %v1841 = vsel %vm1837, %v1821, %v1824
    %v1842 = vsel %vm1840, %v1830, 2102212464
    %v1843 = vsel %vm1839, %v1827, %v1842
    %v1844 = vsel %vm1838, %v1841, %v1843
    %v1845 = vsel %vm1837, %v1824, %v1827
    %v1846 = vsel %vm1840, %v1833, 920167782
    %v1847 = vsel %vm1839, %v1830, %v1846
    %v1848 = vsel %vm1838, %v1845, %v1847
    %v1849 = vsel %vm1837, %v1827, %v1830
    %v1850 = vsel %vm1840, %v1836, 1326507024
    %v1851 = vsel %vm1839, %v1833, %v1850
    %v1852 = vsel %vm1838, %v1849, %v1851
    %v1853 = vshll.u32 %v1813, 8
    %v1854 = vmul.u32.u64.compose %v1853, %v1852
    %v1855 = vextract.low.u32 %v1854
    %v1856 = vextract.high.u32 %v1854
    %v1857 = vmul.u32.u64.compose %v1853, %v1848
    %v1858 = vextract.low.u32 %v1857
    %v1859 = vextract.high.u32 %v1857
    %v1860 = vmul.u32 %v1853, %v1844
    %v1861 = vadd.s32 %v1856, %v1858
    %vm1862 = vc.u32 %v1856, %v1858
    %v1863 = vadd.s32 %v1859, 1
    %v1864 = vsel %vm1862, %v1863, %v1859
    %v1865 = vadd.s32 %v1860, %v1864
    %v1866 = vadd.s32 %v1865, 536870912
    %v1867 = vshrl.u32 %v1866, 30
    %v1868 = vshll.u32 %v1867, 30
    %v1869 = vsub.s32 %v1865, %v1868
    %vm1870 = vcmp.lt.s32.totalorder %v1869, 0
    %v1871 = vsub.s32 0, %v1869
    %v1872 = vsel %vm1870, %v1871, %v1869
    %v1873 = vclz %v1872
    %v1874 = vsub.s32 %v1873, 2
    %vm1875 = vcmp.gt.s32.totalorder 0, %v1874
    %v1876 = vsel %vm1875, 0, %v1874
    %v1877 = vsub.s32 32, %v1876
    %v1878 = vshll.u32 %v1869, %v1876
    %v1879 = vshrl.u32 %v1861, %v1877
    %v1880 = vor.u32 %v1878, %v1879
    %v1881 = vsub.s32 4294967266, %v1876
    %v1882 = vadd.s32 %v1881, 127
    %v1883 = vshll.u32 %v1882, 23
    %v1884 = vor.u32 4788187, %v1883
    %v1885 = vand.u32 2147483647, %v1884
    %v1887 = vcvt.s32.f32 %v1880
    %v1888 = vmul.f32 %v1887, %v1885
    %v1889 = vxor.u32 %v1888, 2147483648
    %v1890 = vsel %vm1807, %v1889, %v1888
    %v1891 = vsub.s32 4, %v1867
    %v1892 = vsel %vm1807, %v1891, %v1867
    %v1893 = vsel %vm1806, %v347, %v1890
    %v1894 = vsel %vm1806, 0, %v1892
    %v1895 = vcosq.f32.pop %v1893
    %v1896 = vsinq.f32.pop %v1893
    %vm1897 = vweird.f32 %v347
    %v1898 = vadd.s32 %v1894, 3
    %v1899 = vand.u32 %v1898, 3
    %vm1900 = vcmp.lt.s32.totalorder %v1899, 2
    %vm1901 = vcmp.eq.s32.totalorder %v1899, 0
    %v1902 = vxor.u32 %v1896, 2147483648
    %v1903 = vsel %vm1901, %v1895, %v1902
    %vm1904 = vcmp.eq.s32.totalorder %v1899, 2
    %v1905 = vxor.u32 %v1895, 2147483648
    %v1906 = vsel %vm1904, %v1905, %v1896
    %v1907 = vsel %vm1900, %v1903, %v1906
    %v1908 = vsel %vm1897, nan, %v1907
    %v1909 = vand.u32 2147483647, %v348
    %vm1910 = vcmp.le.f32.partialorder %v1909, 0.7853982
    %vm1911 = vcmp.lt.s32.totalorder %v348, 0
    %v1912 = vand.u32 %v348, 2139095040
    %v1913 = vshrl.u32 %v1912, 23
    %v1914 = vsub.s32 %v1913, 127
    %v1915 = vand.u32 2147483647, %v348
    %v1916 = vand.u32 %v1915, 8388607
    %v1917 = vor.u32 %v1916, 8388608
    %v1918 = vsub.s32 0, %v1917
    %v1919 = vadd.s32 %v1914, 1
    %vm1920 = vcmp.gt.s32.totalorder %v1919, 0
    %v1921 = vsel %vm1920, %v1919, 0
    %v1922 = vshrl.u32 %v1921, 5
    %v1923 = vand.u32 %v1921, 31
    %v1924 = vsub.s32 32, %v1923
    %v1925 = vshrl.u32 683565275, %v1924
    %v1926 = vshll.u32 683565275, %v1923
    %v1927 = vshrl.u32 2475754826, %v1924
    %v1928 = vor.u32 %v1926, %v1927
    %v1929 = vshll.u32 2475754826, %v1923
    %v1930 = vshrl.u32 2131351028, %v1924
    %v1931 = vor.u32 %v1929, %v1930
    %v1932 = vshll.u32 2131351028, %v1923
    %v1933 = vshrl.u32 2102212464, %v1924
    %v1934 = vor.u32 %v1932, %v1933
    %v1935 = vshll.u32 2102212464, %v1923
    %v1936 = vshrl.u32 920167782, %v1924
    %v1937 = vor.u32 %v1935, %v1936
    %v1938 = vshll.u32 920167782, %v1923
    %v1939 = vshrl.u32 1326507024, %v1924
    %v1940 = vor.u32 %v1938, %v1939
    %vm1941 = vcmp.lt.s32.totalorder %v1922, 1
    %vm1942 = vcmp.lt.s32.totalorder %v1922, 2
    %vm1943 = vcmp.lt.s32.totalorder %v1922, 3
    %vm1944 = vcmp.lt.s32.totalorder %v1922, 4
    %v1945 = vsel %vm1941, %v1925, %v1928
    %v1946 = vsel %vm1944, %v1934, 2102212464
    %v1947 = vsel %vm1943, %v1931, %v1946
    %v1948 = vsel %vm1942, %v1945, %v1947
    %v1949 = vsel %vm1941, %v1928, %v1931
    %v1950 = vsel %vm1944, %v1937, 920167782
    %v1951 = vsel %vm1943, %v1934, %v1950
    %v1952 = vsel %vm1942, %v1949, %v1951
    %v1953 = vsel %vm1941, %v1931, %v1934
    %v1954 = vsel %vm1944, %v1940, 1326507024
    %v1955 = vsel %vm1943, %v1937, %v1954
    %v1956 = vsel %vm1942, %v1953, %v1955
    %v1957 = vshll.u32 %v1917, 8
    %v1958 = vmul.u32.u64.compose %v1957, %v1956
    %v1959 = vextract.low.u32 %v1958
    %v1960 = vextract.high.u32 %v1958
    %v1961 = vmul.u32.u64.compose %v1957, %v1952
    %v1962 = vextract.low.u32 %v1961
    %v1963 = vextract.high.u32 %v1961
    %v1964 = vmul.u32 %v1957, %v1948
    %v1965 = vadd.s32 %v1960, %v1962
    %vm1966 = vc.u32 %v1960, %v1962
    %v1967 = vadd.s32 %v1963, 1
    %v1968 = vsel %vm1966, %v1967, %v1963
    %v1969 = vadd.s32 %v1964, %v1968
    %v1970 = vadd.s32 %v1969, 536870912
    %v1971 = vshrl.u32 %v1970, 30
    %v1972 = vshll.u32 %v1971, 30
    %v1973 = vsub.s32 %v1969, %v1972
    %vm1974 = vcmp.lt.s32.totalorder %v1973, 0
    %v1975 = vsub.s32 0, %v1973
    %v1976 = vsel %vm1974, %v1975, %v1973
    %v1977 = vclz %v1976
    %v1978 = vsub.s32 %v1977, 2
    %vm1979 = vcmp.gt.s32.totalorder 0, %v1978
    %v1980 = vsel %vm1979, 0, %v1978
    %v1981 = vsub.s32 32, %v1980
    %v1982 = vshll.u32 %v1973, %v1980
    %v1983 = vshrl.u32 %v1965, %v1981
    %v1984 = vor.u32 %v1982, %v1983
    %v1985 = vsub.s32 4294967266, %v1980
    %v1986 = vadd.s32 %v1985, 127
    %v1987 = vshll.u32 %v1986, 23
    %v1988 = vor.u32 4788187, %v1987
    %v1989 = vand.u32 2147483647, %v1988
    %v1991 = vcvt.s32.f32 %v1984
    %v1992 = vmul.f32 %v1991, %v1989
    %v1993 = vxor.u32 %v1992, 2147483648
    %v1994 = vsel %vm1911, %v1993, %v1992
    %v1995 = vsub.s32 4, %v1971
    %v1996 = vsel %vm1911, %v1995, %v1971
    %v1997 = vsel %vm1910, %v348, %v1994
    %v1998 = vsel %vm1910, 0, %v1996
    %v1999 = vcosq.f32.pop %v1997
    %v2000 = vsinq.f32.pop %v1997
    %vm2001 = vweird.f32 %v348
    %v2002 = vadd.s32 %v1998, 3
    %v2003 = vand.u32 %v2002, 3
    %vm2004 = vcmp.lt.s32.totalorder %v2003, 2
    %vm2005 = vcmp.eq.s32.totalorder %v2003, 0
    %v2006 = vxor.u32 %v2000, 2147483648
    %v2007 = vsel %vm2005, %v1999, %v2006
    %vm2008 = vcmp.eq.s32.totalorder %v2003, 2
    %v2009 = vxor.u32 %v1999, 2147483648
    %v2010 = vsel %vm2008, %v2009, %v2000
    %v2011 = vsel %vm2004, %v2007, %v2010
    %v2012 = vsel %vm2001, nan, %v2011
    %v2013 = vmul.f32 %v291, %v1284
    %v2014 = vmul.f32 %v298, %v1388
    %v2015 = vmul.f32 %v305, %v1492
    %v2016 = vmul.f32 %v312, %v1596
    %v2017 = vmul.f32 %v319, %v1700
    %v2018 = vmul.f32 %v326, %v1804
    %v2019 = vmul.f32 %v333, %v1908
    %v2020 = vmul.f32 %v340, %v2012
    %v2029 = vrot.slane %v2013, 7
    %v2030 = vrot.slane %v2014, 7
    %v2031 = vrot.slane %v2015, 7
    %v2032 = vrot.slane %v2016, 7
    %v2033 = vrot.slane %v2017, 7
    %v2034 = vrot.slane %v2018, 7
    %v2035 = vrot.slane %v2019, 7
    %v2036 = vrot.slane %v2020, 7
    %vm2045 = vcmask 1040384
    %v2046 = vsel %vm2045, %v1173, %v2029
    %v2047 = vsel %vm2045, %v1174, %v2030
    %v2048 = vsel %vm2045, %v1175, %v2031
    %v2049 = vsel %vm2045, %v1176, %v2032
    %v2050 = vsel %vm2045, %v1177, %v2033
    %v2051 = vsel %vm2045, %v1178, %v2034
    %v2052 = vsel %vm2045, %v1179, %v2035
    %v2053 = vsel %vm2045, %v1180, %v2036
    %v2054 = vadd.f32 %v2046, 0.0
    %v2055 = vadd.f32 %v2047, 0.0
    %v2056 = vadd.f32 %v2048, 0.0
    %v2057 = vadd.f32 %v2049, 0.0
    %v2058 = vadd.f32 %v2050, 0.0
    %v2059 = vadd.f32 %v2051, 0.0
    %v2060 = vadd.f32 %v2052, 0.0
    %v2061 = vadd.f32 %v2053, 0.0
    %v2062 = vld [vmem:[#allocation3] sm:$0xff]
    %v2063 = vld [vmem:[#allocation3 + $0x8] sm:$0xff]
    %v2072 = vcombine.low %v2054, %v2055
    %v2073 = vcombine.low %v2056, %v2057
    %v2075 = vunpack.c.l.s4 1983009808
    %v2076 = vunpack.c.0.s8 %v2075
    %v2077 = vlaneseq
    %v2078 = vshrl.u32 %v2077, 7
    %v2079 = vsub.s32 %v2076, %v2078
    %v2080 = vrot.slane %v2072, %v2079
    %v2082 = vunpack.c.l.s4 1983009808
    %v2083 = vunpack.c.0.s8 %v2082
    %v2084 = vlaneseq
    %v2085 = vshrl.u32 %v2084, 7
    %v2086 = vsub.s32 %v2083, %v2085
    %v2087 = vrot.slane %v2073, %v2086
    %v2088 = vcombine.low %v2080, %v2087
    %v2089 = vcombine.low %v2058, %v2059
    %v2090 = vcombine.low %v2060, %v2061
    %v2092 = vunpack.c.l.s4 1983009808
    %v2093 = vunpack.c.0.s8 %v2092
    %v2094 = vlaneseq
    %v2095 = vshrl.u32 %v2094, 7
    %v2096 = vsub.s32 %v2093, %v2095
    %v2097 = vrot.slane %v2089, %v2096
    %v2099 = vunpack.c.l.s4 1983009808
    %v2100 = vunpack.c.0.s8 %v2099
    %v2101 = vlaneseq
    %v2102 = vshrl.u32 %v2101, 7
    %v2103 = vsub.s32 %v2100, %v2102
    %v2104 = vrot.slane %v2090, %v2103
    %v2105 = vcombine.low %v2097, %v2104
    %v2108 = vadd.f32 %v2062, %v2088
    %v2109 = vadd.f32 %v2063, %v2105
    %v2110 = vmax.f32 %v2108, 0.0
    %v2111 = vmax.f32 %v2109, 0.0
    %v2112 = vmin.f32 %v2110, 1.0
    %v2113 = vmin.f32 %v2111, 1.0
    %2114 = vst [vmem:[#allocation6] sm:$0xff] %v2112
    %2115 = vst [vmem:[#allocation6 + $0x8] sm:$0xff] %v2113
    // Predicated region
    $region14: #{tpu_custom_call.1} parent=1 // pred_check
      _
    $region15: #{tpu_custom_call.1} parent=1 // pred_check_branch
      %2117 = sbr.rel (0) target = $region17
    $region16: #{tpu_custom_call.1} parent=1 // pred_region
      %s2119 = ssub.s32 256, 256
      %2120 = vsyncadd [#allocation5], %s2119
      %s2122 = sshll.u32 [#allocation6], 4
      %s2123 = int_to_ptr.vmem [resolvable:$true] %s2122
      %2125 = dma.vmem_to_hbm [thread:$0]  %s2123, 256, %s2, [#allocation5]
    $region17: #{tpu_custom_call.1} parent=1 // pred_fallthru
      _
    // Predicated region
    $region18: #{tpu_custom_call.1} parent=1 // pred_check
      _
    $region19: #{tpu_custom_call.1} parent=1 // pred_check_branch
      %2127 = sbr.rel (0) target = $region21
    $region20: #{tpu_custom_call.1} parent=1 // pred_region
      %2128 = dma.done [#allocation5], 256
    $region21: #{tpu_custom_call.1} parent=1 // pred_fallthru
      _
    %2129 = vsyncpa [#allocation4], 1
    %2130 = vsyncpa [#allocation5], 1

</llo_original>
